<compile_context>
chip_gen: v6e
topology: v6e:2x2x1
jax: 0.10.0
libtpu: 0.0.40
codegen_flags: <defaults>
</compile_context>

<pallas_src>
import jax
import jax.numpy as jnp
from jax.experimental import pallas as pl
from jax.experimental.pallas import tpu as pltpu

EPS = 1e-5
D = 512
HEAD_PAD = 128  # lane-dense padded head width; real logit is column 0


def domain_classifier_kernel(x_ref, w_ref, bn_ref, w5_ref, b5_ref, o_ref, h_ref):
    l = pl.program_id(0)

    # Load the input batch into the persistent activation scratch once.
    @pl.when(l == 0)
    def _():
        h_ref[...] = x_ref[...].astype(jnp.float32)

    # Linear(512,512) on the MXU: bf16 operands, f32 accumulation.
    # (Layer bias omitted: cancelled exactly by the BN mean subtraction below.)
    z = jnp.dot(h_ref[...].astype(jnp.bfloat16), w_ref[0],
                preferred_element_type=jnp.float32)

    # Training-mode BatchNorm1d (biased variance, eps=1e-5) + ReLU.
    # Single centred pass: centre once, reuse for variance and normalization;
    # gamma folded into the rsqrt scale.
    bn = bn_ref[0]                                   # (2, 512) f32: [gamma; beta]
    mean = jnp.mean(z, axis=0, keepdims=True)
    c = z - mean
    var = jnp.mean(c * c, axis=0, keepdims=True)
    scale = bn[0:1, :] * jax.lax.rsqrt(var + EPS)
    a = jnp.maximum(c * scale + bn[1:2, :], 0.0)
    h_ref[...] = a

    # Head Linear(512,1) (padded to 128 lanes) on the last grid step only.
    @pl.when(l == pl.num_programs(0) - 1)
    def _():
        y = jnp.dot(a.astype(jnp.bfloat16), w5_ref[...],
                    preferred_element_type=jnp.float32) + b5_ref[...]
        o_ref[...] = y.astype(o_ref.dtype)


def pack_params(p):
    """Pack PyTorch-style params into the kernel's streamed layout."""
    w_stack = jnp.stack([w.astype(jnp.bfloat16) for w in p["w"]])          # (4,512,512) bf16
    bn_stack = jnp.stack(
        [jnp.concatenate([g, b], axis=0) for g, b in zip(p["gamma"], p["beta"])]
    )                                                                      # (4,2,512) f32
    w5_pad = jnp.zeros((D, HEAD_PAD), jnp.bfloat16)
    w5_pad = w5_pad.at[:, :1].set(p["w5"].astype(jnp.bfloat16))            # (512,128) bf16
    b5_pad = jnp.zeros((1, HEAD_PAD), jnp.float32).at[:, :1].set(p["b5"])  # (1,128) f32
    return w_stack, bn_stack, w5_pad, b5_pad


def domain_classifier(x, params):
    """x: (N, 512) float32.  Returns (N, 1) float32 logits."""
    n = x.shape[0]
    w_stack, bn_stack, w5_pad, b5_pad = pack_params(params)

    out_pad = pl.pallas_call(
        domain_classifier_kernel,
        out_shape=jax.ShapeDtypeStruct((n, HEAD_PAD), jnp.float32),
        grid_spec=pltpu.PrefetchScalarGridSpec(
            num_scalar_prefetch=0,
            grid=(4,),  # one step per hidden block
            in_specs=[
                pl.BlockSpec((n, D), lambda l: (0, 0)),           # x (DMA'd once)
                pl.BlockSpec((1, D, D), lambda l: (l, 0, 0)),     # streamed layer weight
                pl.BlockSpec((1, 2, D), lambda l: (l, 0, 0)),     # packed gamma/beta
                pl.BlockSpec((D, HEAD_PAD), lambda l: (0, 0)),    # padded head weight
                pl.BlockSpec((1, HEAD_PAD), lambda l: (0, 0)),    # padded head bias
            ],
            out_specs=pl.BlockSpec((n, HEAD_PAD), lambda l: (0, 0)),
            scratch_shapes=[pltpu.VMEM((n, D), jnp.float32)],     # persistent activation
        ),
        compiler_params=pltpu.CompilerParams(
            dimension_semantics=("arbitrary",),                   # sequential layer dep
            vmem_limit_bytes=32 << 20,                            # v7x-safe headroom
        ),
    )(x, w_stack, bn_stack, w5_pad, b5_pad)
    return out_pad[:, :1]


def init_params(key):
    """Deterministic synthetic parameters matching the PyTorch module's shapes.

    Weights are stored transposed vs. PyTorch, i.e. (in, out): y = x @ W + b.
    Layer biases b1..b4 are created for the faithful reference but are NOT fed
    to the kernel (BN's mean subtraction cancels them exactly)."""
    keys = jax.random.split(key, 10)
    p = {"w": [], "b": [], "gamma": [], "beta": []}
    for i in range(4):
        p["w"].append(jax.random.normal(keys[2 * i], (D, D), jnp.float32) * 0.04)
        p["b"].append(jax.random.normal(keys[2 * i + 1], (1, D), jnp.float32) * 0.01)
        p["gamma"].append(jnp.ones((1, D), jnp.float32))
        p["beta"].append(jnp.zeros((1, D), jnp.float32))
    p["w5"] = jax.random.normal(keys[8], (D, 1), jnp.float32) * 0.04
    p["b5"] = jax.random.normal(keys[9], (1, 1), jnp.float32) * 0.01
    return p


def reference_kernel_math(x, params):
    """Pure-JAX reference that mimics the kernel's arithmetic exactly
    (bf16 matmul operands, f32 accumulation, bias-free hidden layers)."""
    h = x.astype(jnp.float32)
    for i in range(4):
        w = params["w"][i].astype(jnp.bfloat16)
        z = jnp.dot(h.astype(jnp.bfloat16), w, preferred_element_type=jnp.float32)
        mean = jnp.mean(z, axis=0, keepdims=True)
        c = z - mean
        var = jnp.mean(c * c, axis=0, keepdims=True)
        scale = params["gamma"][i] * jax.lax.rsqrt(var + EPS)
        h = jnp.maximum(c * scale + params["beta"][i], 0.0)
    w5 = params["w5"].astype(jnp.bfloat16)
    return jnp.dot(h.astype(jnp.bfloat16), w5,
                   preferred_element_type=jnp.float32) + params["b5"]


def reference_forward_f32(x, params):
    """Faithful f32 PyTorch-style forward (training-mode BN, biases included)."""
    h = x
    for i in range(4):
        h = h @ params["w"][i] + params["b"][i]
        mean = jnp.mean(h, axis=0, keepdims=True)
        var = jnp.mean((h - mean) ** 2, axis=0, keepdims=True)
        h = (h - mean) / jnp.sqrt(var + EPS) * params["gamma"][i] + params["beta"][i]
        h = jnp.maximum(h, 0.0)
    return h @ params["w5"] + params["b5"]


if __name__ == "__main__":
    key = jax.random.PRNGKey(0)
    pkey, xkey = jax.random.split(key)
    params = init_params(pkey)

    # small batch consistent with nn.Linear(512, ...) input: (N, 512)
    x = jax.random.normal(xkey, (8, 512), jnp.float32)

    y = jax.block_until_ready(domain_classifier(x, params))
    assert y.shape == (8, 1)

    # Tight check against a reference that mimics the kernel's bf16/f32 math.
    y_exact = reference_kernel_math(x, params)
    assert jnp.allclose(y, y_exact, atol=2e-3, rtol=2e-3), (
        f"kernel-math mismatch: {jnp.max(jnp.abs(y - y_exact))}")

    # Looser check against the faithful f32 PyTorch-style forward (differences
    # come only from bf16 weight/activation quantization on the MXU).
    y_f32 = reference_forward_f32(x, params)
    assert jnp.allclose(y, y_f32, atol=0.15, rtol=0.15), (
        f"f32-reference mismatch: {jnp.max(jnp.abs(y - y_f32))}")

    print("KERNEL_OK")
</pallas_src>

<mosaic_0001>
module attributes {stable_mosaic.version = 11 : i64} {
  func.func @domain_classifier_kernel(%arg0: i32, %arg1: memref<8x512xf32, #tpu.memory_space<vmem>>, %arg2: memref<1x512x512xbf16, #tpu.memory_space<vmem>>, %arg3: memref<1x2x512xf32, #tpu.memory_space<vmem>>, %arg4: memref<512x128xbf16, #tpu.memory_space<vmem>>, %arg5: memref<1x128xf32, #tpu.memory_space<vmem>>, %arg6: memref<8x128xf32, #tpu.memory_space<vmem>>, %arg7: memref<8x512xf32, #tpu.memory_space<vmem>>) attributes {dimension_semantics = [#tpu.dimension_semantics<arbitrary>], iteration_bounds = array<i64: 4>, scalar_prefetch = 0 : i64, scratch_operands = 1 : i64, tpu.core_type = #tpu.core_type<tc>, window_params = [{pipeline_mode = #tpu.pipeline_mode<synchronous>, transform_indices = @transform_0, window_bounds = array<i64: 8, 512>}, {transform_indices = @transform_1, window_bounds = array<i64: 1, 512, 512>}, {transform_indices = @transform_2, window_bounds = array<i64: 1, 2, 512>}, {pipeline_mode = #tpu.pipeline_mode<synchronous>, transform_indices = @transform_3, window_bounds = array<i64: 512, 128>}, {pipeline_mode = #tpu.pipeline_mode<synchronous>, transform_indices = @transform_4, window_bounds = array<i64: 1, 128>}, {pipeline_mode = #tpu.pipeline_mode<synchronous>, transform_indices = @transform_5, window_bounds = array<i64: 8, 128>}]} {
    %c0_i32 = arith.constant 0 : i32
    %0 = arith.cmpi eq, %arg0, %c0_i32 : i32
    %1 = arith.extui %0 : i1 to i32
    %c0_i32_0 = arith.constant 0 : i32
    %2 = arith.cmpi ne, %1, %c0_i32_0 : i32
    scf.if %2 {
      %c0_17 = arith.constant 0 : index
      %c0_18 = arith.constant 0 : index
      %37 = vector.load %arg1[%c0_17, %c0_18] : memref<8x512xf32, #tpu.memory_space<vmem>>, vector<8x512xf32>
      %c0_19 = arith.constant 0 : index
      %c0_20 = arith.constant 0 : index
      %38 = vector.load %arg7[%c0_19, %c0_20] : memref<8x512xf32, #tpu.memory_space<vmem>>, vector<8x512xf32>
      tpu.vector_store %arg7[%c0_19, %c0_20], %37 {strides = array<i32>} : memref<8x512xf32, #tpu.memory_space<vmem>>, vector<8x512xf32>,
    } else {
    }
    %c0 = arith.constant 0 : index
    %c0_1 = arith.constant 0 : index
    %3 = vector.load %arg7[%c0, %c0_1] : memref<8x512xf32, #tpu.memory_space<vmem>>, vector<8x512xf32>
    %4 = arith.truncf %3 : vector<8x512xf32> to vector<8x512xbf16>
    %c0_2 = arith.constant 0 : index
    %c0_3 = arith.constant 0 : index
    %c0_4 = arith.constant 0 : index
    %5 = vector.load %arg2[%c0_2, %c0_3, %c0_4] : memref<1x512x512xbf16, #tpu.memory_space<vmem>>, vector<1x512x512xbf16>
    %6 = vector.shape_cast %5 : vector<1x512x512xbf16> to vector<512x512xbf16>
    %cst = arith.constant dense<0.000000e+00> : vector<8x512xf32>
    %7 = tpu.matmul %4, %6, %cst {dimension_numbers = #tpu.dot_dimension_numbers<[1], [0], [0], [1], [0, 0, 1, 1], [], []>} : vector<8x512xbf16>, vector<512x512xbf16>, vector<8x512xf32> -> vector<8x512xf32>
    %c0_5 = arith.constant 0 : index
    %c0_6 = arith.constant 0 : index
    %c0_7 = arith.constant 0 : index
    %8 = vector.load %arg3[%c0_5, %c0_6, %c0_7] : memref<1x2x512xf32, #tpu.memory_space<vmem>>, vector<1x2x512xf32>
    %9 = vector.shape_cast %8 : vector<1x2x512xf32> to vector<2x512xf32>
    %cst_8 = arith.constant dense<0.000000e+00> : vector<512xf32>
    %10 = vector.multi_reduction <add>, %7, %cst_8 [0] : vector<8x512xf32> to vector<512xf32>
    %11 = vector.shape_cast %10 : vector<512xf32> to vector<1x512xf32>
    %cst_9 = arith.constant 8.000000e+00 : f32
    %12 = vector.broadcast %cst_9 : f32 to vector<1x512xf32>
    %13 = arith.divf %11, %12 : vector<1x512xf32>
    %14 = vector.broadcast %13 : vector<1x512xf32> to vector<8x512xf32>
    %15 = arith.subf %7, %14 : vector<8x512xf32>
    %16 = arith.mulf %15, %15 : vector<8x512xf32>
    %cst_10 = arith.constant dense<0.000000e+00> : vector<512xf32>
    %17 = vector.multi_reduction <add>, %16, %cst_10 [0] : vector<8x512xf32> to vector<512xf32>
    %18 = vector.shape_cast %17 : vector<512xf32> to vector<1x512xf32>
    %cst_11 = arith.constant 8.000000e+00 : f32
    %19 = vector.broadcast %cst_11 : f32 to vector<1x512xf32>
    %20 = arith.divf %18, %19 : vector<1x512xf32>
    %21 = vector.extract_strided_slice %9 {offsets = [0, 0], sizes = [1, 512], strides = [1, 1]} : vector<2x512xf32> to vector<1x512xf32>
    %cst_12 = arith.constant 9.99999974E-6 : f32
    %22 = vector.broadcast %cst_12 : f32 to vector<1x512xf32>
    %23 = arith.addf %20, %22 : vector<1x512xf32>
    %24 = math.rsqrt %23 : vector<1x512xf32>
    %25 = arith.mulf %21, %24 : vector<1x512xf32>
    %26 = vector.broadcast %25 : vector<1x512xf32> to vector<8x512xf32>
    %27 = arith.mulf %15, %26 : vector<8x512xf32>
    %28 = vector.extract_strided_slice %9 {offsets = [1, 0], sizes = [1, 512], strides = [1, 1]} : vector<2x512xf32> to vector<1x512xf32>
    %29 = vector.broadcast %28 : vector<1x512xf32> to vector<8x512xf32>
    %30 = arith.addf %27, %29 : vector<8x512xf32>
    %cst_13 = arith.constant 0.000000e+00 : f32
    %31 = vector.broadcast %cst_13 : f32 to vector<8x512xf32>
    %32 = arith.maximumf %30, %31 : vector<8x512xf32>
    %c0_14 = arith.constant 0 : index
    %c0_15 = arith.constant 0 : index
    %33 = vector.load %arg7[%c0_14, %c0_15] : memref<8x512xf32, #tpu.memory_space<vmem>>, vector<8x512xf32>
    tpu.vector_store %arg7[%c0_14, %c0_15], %32 {strides = array<i32>} : memref<8x512xf32, #tpu.memory_space<vmem>>, vector<8x512xf32>,
    %c3_i32 = arith.constant 3 : i32
    %34 = arith.cmpi eq, %arg0, %c3_i32 : i32
    %35 = arith.extui %34 : i1 to i32
    %c0_i32_16 = arith.constant 0 : i32
    %36 = arith.cmpi ne, %35, %c0_i32_16 : i32
    scf.if %36 {
      %37 = arith.truncf %32 : vector<8x512xf32> to vector<8x512xbf16>
      %c0_17 = arith.constant 0 : index
      %c0_18 = arith.constant 0 : index
      %38 = vector.load %arg4[%c0_17, %c0_18] : memref<512x128xbf16, #tpu.memory_space<vmem>>, vector<512x128xbf16>
      %cst_19 = arith.constant dense<0.000000e+00> : vector<8x128xf32>
      %39 = tpu.matmul %37, %38, %cst_19 {dimension_numbers = #tpu.dot_dimension_numbers<[1], [0], [0], [1], [0, 0, 1, 1], [], []>} : vector<8x512xbf16>, vector<512x128xbf16>, vector<8x128xf32> -> vector<8x128xf32>
      %c0_20 = arith.constant 0 : index
      %c0_21 = arith.constant 0 : index
      %40 = vector.load %arg5[%c0_20, %c0_21] : memref<1x128xf32, #tpu.memory_space<vmem>>, vector<1x128xf32>
      %41 = vector.broadcast %40 : vector<1x128xf32> to vector<8x128xf32>
      %42 = arith.addf %39, %41 : vector<8x128xf32>
      %c0_22 = arith.constant 0 : index
      %c0_23 = arith.constant 0 : index
      %43 = vector.load %arg6[%c0_22, %c0_23] : memref<8x128xf32, #tpu.memory_space<vmem>>, vector<8x128xf32>
      tpu.vector_store %arg6[%c0_22, %c0_23], %42 {strides = array<i32>} : memref<8x128xf32, #tpu.memory_space<vmem>>, vector<8x128xf32>,
    } else {
    }
    return
  }
  func.func @transform_0(%arg0: i32) -> (i32, i32) {
    %c0_i32 = arith.constant 0 : i32
    %c0_i32_0 = arith.constant 0 : i32
    %c0_i32_1 = arith.constant 0 : i32
    return %c0_i32, %c0_i32_0 : i32, i32
  }
  func.func @transform_1(%arg0: i32) -> (i32, i32, i32) {
    %c0_i32 = arith.constant 0 : i32
    %c0_i32_0 = arith.constant 0 : i32
    %c0_i32_1 = arith.constant 0 : i32
    return %arg0, %c0_i32, %c0_i32_0 : i32, i32, i32
  }
  func.func @transform_2(%arg0: i32) -> (i32, i32, i32) {
    %c0_i32 = arith.constant 0 : i32
    %c0_i32_0 = arith.constant 0 : i32
    %c0_i32_1 = arith.constant 0 : i32
    return %arg0, %c0_i32, %c0_i32_0 : i32, i32, i32
  }
  func.func @transform_3(%arg0: i32) -> (i32, i32) {
    %c0_i32 = arith.constant 0 : i32
    %c0_i32_0 = arith.constant 0 : i32
    %c0_i32_1 = arith.constant 0 : i32
    return %c0_i32, %c0_i32_0 : i32, i32
  }
  func.func @transform_4(%arg0: i32) -> (i32, i32) {
    %c0_i32 = arith.constant 0 : i32
    %c0_i32_0 = arith.constant 0 : i32
    %c0_i32_1 = arith.constant 0 : i32
    return %c0_i32, %c0_i32_0 : i32, i32
  }
  func.func @transform_5(%arg0: i32) -> (i32, i32) {
    %c0_i32 = arith.constant 0 : i32
    %c0_i32_0 = arith.constant 0 : i32
    %c0_i32_1 = arith.constant 0 : i32
    return %c0_i32, %c0_i32_0 : i32, i32
  }
}

</mosaic_0001>

<llo_original>
// kernel: tpu_custom_call.1
$region0: #{tpu_custom_call.1}
  #allocation0 [shape = 'u32[]', space=smem, size = 0x4, offset = 0x4, fixed_abs, tag = 'smem constant byte address 0x4 - core index']
  #allocation1 [shape = 'u32[144,128]{1,0:T(1,128)}', space=vmem, size = 0x12000, scoped, tag = 'internal scratch']
  #allocation2 [shape = 'f32[8,512]{1,0:T(8,128)}', space=vmem, size = 0x4000, scoped, tag = 'scratch operand']
  %s0 = inlined_call_operand.hbm [shape: f32[8,512], index: 0, kind: input, shape index: {}]
  %s1 = inlined_call_operand.hbm [shape: bf16[4,512,512], index: 1, kind: input, shape index: {}]
  %s2 = inlined_call_operand.hbm [shape: f32[4,2,512], index: 2, kind: input, shape index: {}]
  %s3 = inlined_call_operand.hbm [shape: bf16[512,128], index: 3, kind: input, shape index: {}]
  %s4 = inlined_call_operand.hbm [shape: f32[1,128], index: 4, kind: input, shape index: {}]
  %s5 = inlined_call_operand.hbm [shape: f32[8,128], index: 5, kind: output, shape index: {}]
  %s6 = sld [smem:[#allocation0]]
  $region81: #{tpu_custom_call.1} parent=0
    _
  %s8 = ssub.s32 1, %s6
  %s9 = scalar_select 0, %s8, %s6
  $region1: #{tpu_custom_call.1} parent=0
    #allocation3 [shape = 'u8[16384]{0}', space=vmem, size = 0x4000, scoped, tag = 'input window, operand 0, single buffered']
    #allocation4 [shape = 's32[2]{0}', space=sflag, size = 0x8, scoped, tag = 'scoped memory for tpu_custom_call.1']
    #allocation5 [shape = 's32[2]{0}', space=sflag, size = 0x8, scoped, tag = 'scoped memory for tpu_custom_call.1']
    #allocation6 [shape = 'u8[1048576]{0}', space=vmem, size = 0x100000, scoped, tag = 'input window, operand 1']
    #allocation7 [shape = 's32[2]{0}', space=sflag, size = 0x8, scoped, tag = 'scoped memory for tpu_custom_call.1']
    #allocation8 [shape = 'u8[8192]{0}', space=vmem, size = 0x2000, scoped, tag = 'input window, operand 2']
    #allocation9 [shape = 'u8[131072]{0}', space=vmem, size = 0x20000, scoped, tag = 'input window, operand 3, single buffered']
    #allocation10 [shape = 's32[1]{0}', space=sflag, size = 0x4, scoped, tag = 'scoped memory for tpu_custom_call.1']
    #allocation11 [shape = 'u8[512]{0}', space=vmem, size = 0x400, scoped, tag = 'input window, operand 4, single buffered']
    #allocation12 [shape = 'u8[4096]{0}', space=vmem, size = 0x1000, scoped, tag = 'output window, operand 0, single buffered']
    %10 = vsyncpa [#allocation4], 0
    %11 = vsyncpa [#allocation7], 0
    %s12 = scalar_lea.sflag [#allocation7], 1
    %13 = vsyncpa %s12, 0
    %14 = vsyncpa [#allocation10], 0
    %15 = vsyncpa [#allocation5], 0
    loop: start=0, step=1, limit=6
    $region2: #{tpu_custom_call.1} parent=1 // loop_pre_header
      _
    $region3: #{tpu_custom_call.1} parent=1 // loop_header
      %s17 = sphi 0, %s21
      %p18 = scmp.ge.s32.totalorder %s17, 6
      %s25 = sphi 0, %s25
      %s27 = sphi 0, %s25
      %s28 = sphi 0, %s27
      %s42 = sphi 0, %s28
      %s48 = sphi 0, %s50
      %s51 = sphi 0, %s48
      %s52 = sphi 0, %s51
      %s68 = sphi 0, %s52
      %s74 = sphi 0, %s76
      %s77 = sphi 0, %s74
      %s78 = sphi 0, %s77
      %s94 = sphi 0, %s78
      %s98 = sphi 0, %s98
      %s100 = sphi 0, %s98
      %s101 = sphi 0, %s100
      %s115 = sphi 0, %s101
      %s119 = sphi 0, %s119
      %s121 = sphi 0, %s119
      %s122 = sphi 0, %s121
      %s136 = sphi 0, %s122
      %s140 = sphi 0, %s140
      %s142 = sphi 0, %s140
      %s143 = sphi 0, %s142
      %s157 = sphi 0, %s143
    $region4: #{tpu_custom_call.1} parent=1 // loop_header_branch
      %20 = sbr.rel (%p18) target = $region8
    $region5: #{tpu_custom_call.1} parent=1 // loop_body
      %s22 = ssub.s32 %s17, 1
      %s23 = ssub.s32 %s17, 2
      %s24 = sadd.s32 %s17, 1
      %s26 = sadd.s32 %s25, 1
      %p29 = scmp.eq.s32.totalorder %s17, 3
      %p30 = scmp.ne.s32.totalorder %s25, %s27
      %p31 = scmp.eq.s32.totalorder %s17, 0
      %p32 = por %p30, %p31
      %p33 = scmp.ne.s32.totalorder %s25, %s27
      %p34 = scmp.eq.s32.totalorder %s22, 3
      %p35 = por %p33, %p34
      %p36 = scmp.ne.s32.totalorder %s27, %s28
      %p37 = scmp.eq.s32.totalorder %s22, 0
      %p38 = por %p36, %p37
      %p39 = scmp.ne.s32.totalorder %s27, %s28
      %p40 = scmp.eq.s32.totalorder %s23, 3
      %p41 = por %p39, %p40
      %p43 = scmp.ne.s32.totalorder %s28, %s42
      %p44 = scmp.eq.s32.totalorder %s23, 0
      %p45 = por %p43, %p44
      %s46 = ssub.s32 %s17, %s24
      %p47 = scmp.eq.s32.totalorder %s46, 0
      %s49 = sadd.s32 %s48, 1
      %s50 = scalar_select %p47, %s48, %s49
      %p53 = pneg %p47
      %p54 = scmp.eq.s32.totalorder %s17, 3
      %p55 = por %p53, %p54
      %p56 = scmp.ne.s32.totalorder %s48, %s51
      %p57 = scmp.eq.s32.totalorder %s17, 0
      %p58 = por %p56, %p57
      %p59 = scmp.ne.s32.totalorder %s48, %s51
      %p60 = scmp.eq.s32.totalorder %s22, 3
      %p61 = por %p59, %p60
      %p62 = scmp.ne.s32.totalorder %s51, %s52
      %p63 = scmp.eq.s32.totalorder %s22, 0
      %p64 = por %p62, %p63
      %p65 = scmp.ne.s32.totalorder %s51, %s52
      %p66 = scmp.eq.s32.totalorder %s23, 3
      %p67 = por %p65, %p66
      %p69 = scmp.ne.s32.totalorder %s52, %s68
      %p70 = scmp.eq.s32.totalorder %s23, 0
      %p71 = por %p69, %p70
      %s72 = ssub.s32 %s17, %s24
      %p73 = scmp.eq.s32.totalorder %s72, 0
      %s75 = sadd.s32 %s74, 1
      %s76 = scalar_select %p73, %s74, %s75
      %p79 = pneg %p73
      %p80 = scmp.eq.s32.totalorder %s17, 3
      %p81 = por %p79, %p80
      %p82 = scmp.ne.s32.totalorder %s74, %s77
      %p83 = scmp.eq.s32.totalorder %s17, 0
      %p84 = por %p82, %p83
      %p85 = scmp.ne.s32.totalorder %s74, %s77
      %p86 = scmp.eq.s32.totalorder %s22, 3
      %p87 = por %p85, %p86
      %p88 = scmp.ne.s32.totalorder %s77, %s78
      %p89 = scmp.eq.s32.totalorder %s22, 0
      %p90 = por %p88, %p89
      %p91 = scmp.ne.s32.totalorder %s77, %s78
      %p92 = scmp.eq.s32.totalorder %s23, 3
      %p93 = por %p91, %p92
      %p95 = scmp.ne.s32.totalorder %s78, %s94
      %p96 = scmp.eq.s32.totalorder %s23, 0
      %p97 = por %p95, %p96
      %s99 = sadd.s32 %s98, 1
      %p102 = scmp.eq.s32.totalorder %s17, 3
      %p103 = scmp.ne.s32.totalorder %s98, %s100
      %p104 = scmp.eq.s32.totalorder %s17, 0
      %p105 = por %p103, %p104
      %p106 = scmp.ne.s32.totalorder %s98, %s100
      %p107 = scmp.eq.s32.totalorder %s22, 3
      %p108 = por %p106, %p107
      %p109 = scmp.ne.s32.totalorder %s100, %s101
      %p110 = scmp.eq.s32.totalorder %s22, 0
      %p111 = por %p109, %p110
      %p112 = scmp.ne.s32.totalorder %s100, %s101
      %p113 = scmp.eq.s32.totalorder %s23, 3
      %p114 = por %p112, %p113
      %p116 = scmp.ne.s32.totalorder %s101, %s115
      %p117 = scmp.eq.s32.totalorder %s23, 0
      %p118 = por %p116, %p117
      %s120 = sadd.s32 %s119, 1
      %p123 = scmp.eq.s32.totalorder %s17, 3
      %p124 = scmp.ne.s32.totalorder %s119, %s121
      %p125 = scmp.eq.s32.totalorder %s17, 0
      %p126 = por %p124, %p125
      %p127 = scmp.ne.s32.totalorder %s119, %s121
      %p128 = scmp.eq.s32.totalorder %s22, 3
      %p129 = por %p127, %p128
      %p130 = scmp.ne.s32.totalorder %s121, %s122
      %p131 = scmp.eq.s32.totalorder %s22, 0
      %p132 = por %p130, %p131
      %p133 = scmp.ne.s32.totalorder %s121, %s122
      %p134 = scmp.eq.s32.totalorder %s23, 3
      %p135 = por %p133, %p134
      %p137 = scmp.ne.s32.totalorder %s122, %s136
      %p138 = scmp.eq.s32.totalorder %s23, 0
      %p139 = por %p137, %p138
      %s141 = sadd.s32 %s140, 1
      %p144 = scmp.eq.s32.totalorder %s17, 3
      %p145 = scmp.ne.s32.totalorder %s140, %s142
      %p146 = scmp.eq.s32.totalorder %s17, 0
      %p147 = por %p145, %p146
      %p148 = scmp.ne.s32.totalorder %s140, %s142
      %p149 = scmp.eq.s32.totalorder %s22, 3
      %p150 = por %p148, %p149
      %p151 = scmp.ne.s32.totalorder %s142, %s143
      %p152 = scmp.eq.s32.totalorder %s22, 0
      %p153 = por %p151, %p152
      %p154 = scmp.ne.s32.totalorder %s142, %s143
      %p155 = scmp.eq.s32.totalorder %s23, 3
      %p156 = por %p154, %p155
      %p158 = scmp.ne.s32.totalorder %s143, %s157
      %p159 = scmp.eq.s32.totalorder %s23, 0
      %p160 = por %p158, %p159
      %p161 = scmp.le.s32.totalorder 1, %s17
      %p162 = scmp.lt.s32.totalorder %s17, 5
      %p163 = pnand %p161, %p162
      %p164 = pneg %p163
      // Predicated region
      $region9: #{tpu_custom_call.1} parent=5 // pred_check
        _
      $region10: #{tpu_custom_call.1} parent=5 // pred_check_branch
        %166 = sbr.rel (%p163) target = $region12
      $region11: #{tpu_custom_call.1} parent=5 // pred_region
        %s167 = ssub.s32 %s17, 1
        // Predicated region
        $region13: #{tpu_custom_call.1} parent=11 // pred_check
          %p168 = pneg %p38
        $region14: #{tpu_custom_call.1} parent=11 // pred_check_branch
          %170 = sbr.rel (%p168) target = $region16
        $region15: #{tpu_custom_call.1} parent=11 // pred_region
          %s172 = ssub.s32 512, 512
          %173 = vsyncadd [#allocation4], %s172
          %s175 = sshll.u32 [#allocation3], 4
          %s176 = int_to_ptr.vmem [resolvable:$true] %s175
          %178 = dma.hbm_to_vmem [thread:$0]  %s0, 512, %s176, [#allocation4]
        $region16: #{tpu_custom_call.1} parent=11 // pred_fallthru
          _
        // Predicated region
        $region17: #{tpu_custom_call.1} parent=11 // pred_check
          %p179 = pneg %p111
        $region18: #{tpu_custom_call.1} parent=11 // pred_check_branch
          %181 = sbr.rel (%p179) target = $region20
        $region19: #{tpu_custom_call.1} parent=11 // pred_region
          %s183 = ssub.s32 4096, 4096
          %184 = vsyncadd [#allocation10], %s183
          %s185 = sshll.u32 [#allocation9], 4
          %s186 = int_to_ptr.vmem [resolvable:$true] %s185
          %191 = dma.hbm_to_vmem [thread:$0]  %s3, 4096, %s186, [#allocation10], 64, 64, 4
        $region20: #{tpu_custom_call.1} parent=11 // pred_fallthru
          _
        // Predicated region
        $region21: #{tpu_custom_call.1} parent=11 // pred_check
          %p192 = pneg %p132
        $region22: #{tpu_custom_call.1} parent=11 // pred_check_branch
          %194 = sbr.rel (%p192) target = $region24
        $region23: #{tpu_custom_call.1} parent=11 // pred_region
          %s196 = ssub.s32 16, 16
          %197 = vsyncadd [#allocation10], %s196
          %s199 = sshll.u32 [#allocation11], 4
          %s200 = int_to_ptr.vmem [resolvable:$true] %s199
          %202 = dma.hbm_to_vmem [thread:$0]  %s4, 16, %s200, [#allocation10]
        $region24: #{tpu_custom_call.1} parent=11 // pred_fallthru
          _
      $region12: #{tpu_custom_call.1} parent=5 // pred_fallthru
        _
      %p203 = scmp.lt.s32.totalorder %s17, 4
      // Predicated region
      $region25: #{tpu_custom_call.1} parent=5 // pred_check
        %p204 = pneg %p203
      $region26: #{tpu_custom_call.1} parent=5 // pred_check_branch
        %206 = sbr.rel (%p204) target = $region28
      $region27: #{tpu_custom_call.1} parent=5 // pred_region
        // Predicated region
        $region29: #{tpu_custom_call.1} parent=27 // pred_check
          %p207 = pneg %p58
        $region30: #{tpu_custom_call.1} parent=27 // pred_check_branch
          %209 = sbr.rel (%p207) target = $region32
        $region31: #{tpu_custom_call.1} parent=27 // pred_region
          %s210 = sand.u32 %s17, 1
          %s211 = scalar_lea.sflag [#allocation7], %s210
          %s212 = sand.u32 %s48, 1
          %s213 = smul.addr %s212, 1024
          %s214 = scalar_lea.vmem [#allocation6], %s213
          %s216 = ssub.s32 16384, 16384
          %217 = vsyncadd %s211, %s216
          %s218 = smul.addr %s17, 256
          %s219 = smul.addr %s218, 64
          %s220 = scalar_lea.hbm %s1, %s219
          %s221 = sshll.u32 %s214, 4
          %s222 = int_to_ptr.vmem [resolvable:$true] %s221
          %227 = dma.hbm_to_vmem [thread:$0]  %s220, 16384, %s222, %s211, 256, 256, 16
        $region32: #{tpu_custom_call.1} parent=27 // pred_fallthru
          _
        // Predicated region
        $region33: #{tpu_custom_call.1} parent=27 // pred_check
          %p228 = pneg %p84
        $region34: #{tpu_custom_call.1} parent=27 // pred_check_branch
          %230 = sbr.rel (%p228) target = $region36
        $region35: #{tpu_custom_call.1} parent=27 // pred_region
          %s231 = sand.u32 %s17, 1
          %s232 = scalar_lea.sflag [#allocation7], %s231
          %s233 = sand.u32 %s74, 1
          %s234 = smul.addr %s233, 8
          %s235 = scalar_lea.vmem [#allocation8], %s234
          %s237 = ssub.s32 128, 128
          %238 = vsyncadd %s232, %s237
          %s239 = smul.addr %s17, 4
          %s240 = smul.addr %s239, 32
          %s241 = scalar_lea.hbm %s2, %s240
          %s243 = sshll.u32 %s235, 4
          %s244 = int_to_ptr.vmem [resolvable:$true] %s243
          %246 = dma.hbm_to_vmem [thread:$0]  %s241, 128, %s244, %s232
        $region36: #{tpu_custom_call.1} parent=27 // pred_fallthru
          _
      $region28: #{tpu_custom_call.1} parent=5 // pred_fallthru
        _
      %p247 = scmp.le.s32.totalorder 1, %s17
      %p248 = scmp.lt.s32.totalorder %s17, 5
      %p249 = pnand %p247, %p248
      %p250 = pneg %p249
      // Predicated region
      $region37: #{tpu_custom_call.1} parent=5 // pred_check
        _
      $region38: #{tpu_custom_call.1} parent=5 // pred_check_branch
        %252 = sbr.rel (%p249) target = $region40
      $region39: #{tpu_custom_call.1} parent=5 // pred_region
        %s253 = ssub.s32 %s17, 1
        // Predicated region
        $region41: #{tpu_custom_call.1} parent=39 // pred_check
          %p254 = pneg %p38
        $region42: #{tpu_custom_call.1} parent=39 // pred_check_branch
          %256 = sbr.rel (%p254) target = $region44
        $region43: #{tpu_custom_call.1} parent=39 // pred_region
          %257 = dma.done [#allocation4], 512
        $region44: #{tpu_custom_call.1} parent=39 // pred_fallthru
          _
        %s258 = sand.u32 %s22, 1
        %s259 = scalar_lea.sflag [#allocation7], %s258
        %s260 = sand.u32 %s51, 1
        %s261 = smul.addr %s260, 1024
        %s262 = scalar_lea.vmem [#allocation6], %s261
        // Predicated region
        $region45: #{tpu_custom_call.1} parent=39 // pred_check
          %p263 = pneg %p64
        $region46: #{tpu_custom_call.1} parent=39 // pred_check_branch
          %265 = sbr.rel (%p263) target = $region48
        $region47: #{tpu_custom_call.1} parent=39 // pred_region
          %266 = dma.done %s259, 16384
        $region48: #{tpu_custom_call.1} parent=39 // pred_fallthru
          _
        %s267 = sand.u32 %s22, 1
        %s268 = scalar_lea.sflag [#allocation7], %s267
        %s269 = sand.u32 %s77, 1
        %s270 = smul.addr %s269, 8
        %s271 = scalar_lea.vmem [#allocation8], %s270
        // Predicated region
        $region49: #{tpu_custom_call.1} parent=39 // pred_check
          %p272 = pneg %p90
        $region50: #{tpu_custom_call.1} parent=39 // pred_check_branch
          %274 = sbr.rel (%p272) target = $region52
        $region51: #{tpu_custom_call.1} parent=39 // pred_region
          %275 = dma.done %s268, 128
        $region52: #{tpu_custom_call.1} parent=39 // pred_fallthru
          _
        // Predicated region
        $region53: #{tpu_custom_call.1} parent=39 // pred_check
          %p276 = pneg %p111
        $region54: #{tpu_custom_call.1} parent=39 // pred_check_branch
          %278 = sbr.rel (%p276) target = $region56
        $region55: #{tpu_custom_call.1} parent=39 // pred_region
          %279 = dma.done [#allocation10], 4096
        $region56: #{tpu_custom_call.1} parent=39 // pred_fallthru
          _
        // Predicated region
        $region57: #{tpu_custom_call.1} parent=39 // pred_check
          %p280 = pneg %p132
        $region58: #{tpu_custom_call.1} parent=39 // pred_check_branch
          %282 = sbr.rel (%p280) target = $region60
        $region59: #{tpu_custom_call.1} parent=39 // pred_region
          %283 = dma.done [#allocation10], 16
        $region60: #{tpu_custom_call.1} parent=39 // pred_fallthru
          _
        %p284 = pneg %p38
        %p285 = pneg %p35
        %s286 = sand.u32 %s22, 1
        %s287 = scalar_lea.sflag [#allocation7], %s286
        %s288 = sand.u32 %s51, 1
        %s289 = smul.addr %s288, 1024
        %s290 = scalar_lea.vmem [#allocation6], %s289
        %p291 = pneg %p64
        %p292 = pneg %p61
        %s293 = sand.u32 %s22, 1
        %s294 = scalar_lea.sflag [#allocation7], %s293
        %s295 = sand.u32 %s77, 1
        %s296 = smul.addr %s295, 8
        %s297 = scalar_lea.vmem [#allocation8], %s296
        %p298 = pneg %p90
        %p299 = pneg %p87
        %p300 = pneg %p111
        %p301 = pneg %p108
        %p302 = pneg %p132
        %p303 = pneg %p129
        %p304 = pneg %p153
        %p305 = pneg %p150
        %p307 = scmp.eq.s32.totalorder %s22, 0
        // Predicated region
        $region61: #{tpu_custom_call.1} parent=39 // pred_check
          %p308 = pneg %p307
        $region62: #{tpu_custom_call.1} parent=39 // pred_check_branch
          %310 = sbr.rel (%p308) target = $region64
        $region63: #{tpu_custom_call.1} parent=39 // pred_region
          %v311 = vld [vmem:[#allocation3] sm:$0xff]
          %v312 = vld [vmem:[#allocation3 + $0x8] sm:$0xff]
          %v313 = vld [vmem:[#allocation3 + $0x10] sm:$0xff]
          %v314 = vld [vmem:[#allocation3 + $0x18] sm:$0xff]
          %315 = vst [vmem:[#allocation2] sm:$0xff] %v311
          %316 = vst [vmem:[#allocation2 + $0x8] sm:$0xff] %v312
          %317 = vst [vmem:[#allocation2 + $0x10] sm:$0xff] %v313
          %318 = vst [vmem:[#allocation2 + $0x18] sm:$0xff] %v314
        $region64: #{tpu_custom_call.1} parent=39 // pred_fallthru
          _
        %v319 = vld [vmem:[#allocation2] sm:$0xff]
        %v320 = vld [vmem:[#allocation2 + $0x8] sm:$0xff]
        %v321 = vld [vmem:[#allocation2 + $0x10] sm:$0xff]
        %v322 = vld [vmem:[#allocation2 + $0x18] sm:$0xff]
        %v323 = vpack.c.bf16 %v319, %v319
        %v324 = vpack.c.bf16 %v320, %v320
        %v325 = vpack.c.bf16 %v321, %v321
        %v326 = vpack.c.bf16 %v322, %v322
        %v327 = vld [vmem:[%s262] sm:$0xff]
        %v328 = vld [vmem:[%s262 + $0x8] sm:$0xff]
        %v329 = vld [vmem:[%s262 + $0x10] sm:$0xff]
        %v330 = vld [vmem:[%s262 + $0x18] sm:$0xff]
        %v331 = vld [vmem:[%s262 + $0x20] sm:$0xff]
        %v332 = vld [vmem:[%s262 + $0x28] sm:$0xff]
        %v333 = vld [vmem:[%s262 + $0x30] sm:$0xff]
        %v334 = vld [vmem:[%s262 + $0x38] sm:$0xff]
        %v335 = vld [vmem:[%s262 + $0x40] sm:$0xff]
        %v336 = vld [vmem:[%s262 + $0x48] sm:$0xff]
        %v337 = vld [vmem:[%s262 + $0x50] sm:$0xff]
        %v338 = vld [vmem:[%s262 + $0x58] sm:$0xff]
        %v339 = vld [vmem:[%s262 + $0x60] sm:$0xff]
        %v340 = vld [vmem:[%s262 + $0x68] sm:$0xff]
        %v341 = vld [vmem:[%s262 + $0x70] sm:$0xff]
        %v342 = vld [vmem:[%s262 + $0x78] sm:$0xff]
        %v343 = vld [vmem:[%s262 + $0x80] sm:$0xff]
        %v344 = vld [vmem:[%s262 + $0x88] sm:$0xff]
        %v345 = vld [vmem:[%s262 + $0x90] sm:$0xff]
        %v346 = vld [vmem:[%s262 + $0x98] sm:$0xff]
        %v347 = vld [vmem:[%s262 + $0xa0] sm:$0xff]
        %v348 = vld [vmem:[%s262 + $0xa8] sm:$0xff]
        %v349 = vld [vmem:[%s262 + $0xb0] sm:$0xff]
        %v350 = vld [vmem:[%s262 + $0xb8] sm:$0xff]
        %v351 = vld [vmem:[%s262 + $0xc0] sm:$0xff]
        %v352 = vld [vmem:[%s262 + $0xc8] sm:$0xff]
        %v353 = vld [vmem:[%s262 + $0xd0] sm:$0xff]
        %v354 = vld [vmem:[%s262 + $0xd8] sm:$0xff]
        %v355 = vld [vmem:[%s262 + $0xe0] sm:$0xff]
        %v356 = vld [vmem:[%s262 + $0xe8] sm:$0xff]
        %v357 = vld [vmem:[%s262 + $0xf0] sm:$0xff]
        %v358 = vld [vmem:[%s262 + $0xf8] sm:$0xff]
        %v359 = vld [vmem:[%s262 + $0x100] sm:$0xff]
        %v360 = vld [vmem:[%s262 + $0x108] sm:$0xff]
        %v361 = vld [vmem:[%s262 + $0x110] sm:$0xff]
        %v362 = vld [vmem:[%s262 + $0x118] sm:$0xff]
        %v363 = vld [vmem:[%s262 + $0x120] sm:$0xff]
        %v364 = vld [vmem:[%s262 + $0x128] sm:$0xff]
        %v365 = vld [vmem:[%s262 + $0x130] sm:$0xff]
        %v366 = vld [vmem:[%s262 + $0x138] sm:$0xff]
        %v367 = vld [vmem:[%s262 + $0x140] sm:$0xff]
        %v368 = vld [vmem:[%s262 + $0x148] sm:$0xff]
        %v369 = vld [vmem:[%s262 + $0x150] sm:$0xff]
        %v370 = vld [vmem:[%s262 + $0x158] sm:$0xff]
        %v371 = vld [vmem:[%s262 + $0x160] sm:$0xff]
        %v372 = vld [vmem:[%s262 + $0x168] sm:$0xff]
        %v373 = vld [vmem:[%s262 + $0x170] sm:$0xff]
        %v374 = vld [vmem:[%s262 + $0x178] sm:$0xff]
        %v375 = vld [vmem:[%s262 + $0x180] sm:$0xff]
        %v376 = vld [vmem:[%s262 + $0x188] sm:$0xff]
        %v377 = vld [vmem:[%s262 + $0x190] sm:$0xff]
        %v378 = vld [vmem:[%s262 + $0x198] sm:$0xff]
        %v379 = vld [vmem:[%s262 + $0x1a0] sm:$0xff]
        %v380 = vld [vmem:[%s262 + $0x1a8] sm:$0xff]
        %v381 = vld [vmem:[%s262 + $0x1b0] sm:$0xff]
        %v382 = vld [vmem:[%s262 + $0x1b8] sm:$0xff]
        %v383 = vld [vmem:[%s262 + $0x1c0] sm:$0xff]
        %v384 = vld [vmem:[%s262 + $0x1c8] sm:$0xff]
        %v385 = vld [vmem:[%s262 + $0x1d0] sm:$0xff]
        %v386 = vld [vmem:[%s262 + $0x1d8] sm:$0xff]
        %v387 = vld [vmem:[%s262 + $0x1e0] sm:$0xff]
        %v388 = vld [vmem:[%s262 + $0x1e8] sm:$0xff]
        %v389 = vld [vmem:[%s262 + $0x1f0] sm:$0xff]
        %v390 = vld [vmem:[%s262 + $0x1f8] sm:$0xff]
        %v391 = vld [vmem:[%s262 + $0x200] sm:$0xff]
        %v392 = vld [vmem:[%s262 + $0x208] sm:$0xff]
        %v393 = vld [vmem:[%s262 + $0x210] sm:$0xff]
        %v394 = vld [vmem:[%s262 + $0x218] sm:$0xff]
        %v395 = vld [vmem:[%s262 + $0x220] sm:$0xff]
        %v396 = vld [vmem:[%s262 + $0x228] sm:$0xff]
        %v397 = vld [vmem:[%s262 + $0x230] sm:$0xff]
        %v398 = vld [vmem:[%s262 + $0x238] sm:$0xff]
        %v399 = vld [vmem:[%s262 + $0x240] sm:$0xff]
        %v400 = vld [vmem:[%s262 + $0x248] sm:$0xff]
        %v401 = vld [vmem:[%s262 + $0x250] sm:$0xff]
        %v402 = vld [vmem:[%s262 + $0x258] sm:$0xff]
        %v403 = vld [vmem:[%s262 + $0x260] sm:$0xff]
        %v404 = vld [vmem:[%s262 + $0x268] sm:$0xff]
        %v405 = vld [vmem:[%s262 + $0x270] sm:$0xff]
        %v406 = vld [vmem:[%s262 + $0x278] sm:$0xff]
        %v407 = vld [vmem:[%s262 + $0x280] sm:$0xff]
        %v408 = vld [vmem:[%s262 + $0x288] sm:$0xff]
        %v409 = vld [vmem:[%s262 + $0x290] sm:$0xff]
        %v410 = vld [vmem:[%s262 + $0x298] sm:$0xff]
        %v411 = vld [vmem:[%s262 + $0x2a0] sm:$0xff]
        %v412 = vld [vmem:[%s262 + $0x2a8] sm:$0xff]
        %v413 = vld [vmem:[%s262 + $0x2b0] sm:$0xff]
        %v414 = vld [vmem:[%s262 + $0x2b8] sm:$0xff]
        %v415 = vld [vmem:[%s262 + $0x2c0] sm:$0xff]
        %v416 = vld [vmem:[%s262 + $0x2c8] sm:$0xff]
        %v417 = vld [vmem:[%s262 + $0x2d0] sm:$0xff]
        %v418 = vld [vmem:[%s262 + $0x2d8] sm:$0xff]
        %v419 = vld [vmem:[%s262 + $0x2e0] sm:$0xff]
        %v420 = vld [vmem:[%s262 + $0x2e8] sm:$0xff]
        %v421 = vld [vmem:[%s262 + $0x2f0] sm:$0xff]
        %v422 = vld [vmem:[%s262 + $0x2f8] sm:$0xff]
        %v423 = vld [vmem:[%s262 + $0x300] sm:$0xff]
        %v424 = vld [vmem:[%s262 + $0x308] sm:$0xff]
        %v425 = vld [vmem:[%s262 + $0x310] sm:$0xff]
        %v426 = vld [vmem:[%s262 + $0x318] sm:$0xff]
        %v427 = vld [vmem:[%s262 + $0x320] sm:$0xff]
        %v428 = vld [vmem:[%s262 + $0x328] sm:$0xff]
        %v429 = vld [vmem:[%s262 + $0x330] sm:$0xff]
        %v430 = vld [vmem:[%s262 + $0x338] sm:$0xff]
        %v431 = vld [vmem:[%s262 + $0x340] sm:$0xff]
        %v432 = vld [vmem:[%s262 + $0x348] sm:$0xff]
        %v433 = vld [vmem:[%s262 + $0x350] sm:$0xff]
        %v434 = vld [vmem:[%s262 + $0x358] sm:$0xff]
        %v435 = vld [vmem:[%s262 + $0x360] sm:$0xff]
        %v436 = vld [vmem:[%s262 + $0x368] sm:$0xff]
        %v437 = vld [vmem:[%s262 + $0x370] sm:$0xff]
        %v438 = vld [vmem:[%s262 + $0x378] sm:$0xff]
        %v439 = vld [vmem:[%s262 + $0x380] sm:$0xff]
        %v440 = vld [vmem:[%s262 + $0x388] sm:$0xff]
        %v441 = vld [vmem:[%s262 + $0x390] sm:$0xff]
        %v442 = vld [vmem:[%s262 + $0x398] sm:$0xff]
        %v443 = vld [vmem:[%s262 + $0x3a0] sm:$0xff]
        %v444 = vld [vmem:[%s262 + $0x3a8] sm:$0xff]
        %v445 = vld [vmem:[%s262 + $0x3b0] sm:$0xff]
        %v446 = vld [vmem:[%s262 + $0x3b8] sm:$0xff]
        %v447 = vld [vmem:[%s262 + $0x3c0] sm:$0xff]
        %v448 = vld [vmem:[%s262 + $0x3c8] sm:$0xff]
        %v449 = vld [vmem:[%s262 + $0x3d0] sm:$0xff]
        %v450 = vld [vmem:[%s262 + $0x3d8] sm:$0xff]
        %v451 = vld [vmem:[%s262 + $0x3e0] sm:$0xff]
        %v452 = vld [vmem:[%s262 + $0x3e8] sm:$0xff]
        %v453 = vld [vmem:[%s262 + $0x3f0] sm:$0xff]
        %v454 = vld [vmem:[%s262 + $0x3f8] sm:$0xff]
        %v583 = vunpack.c.l.b16 %v327
        %v584 = vunpack.c.h.b16 %v327
        %v585 = vunpack.c.l.b16 %v328
        %v586 = vunpack.c.h.b16 %v328
        %v587 = vunpack.c.l.b16 %v329
        %v588 = vunpack.c.h.b16 %v329
        %v589 = vunpack.c.l.b16 %v330
        %v590 = vunpack.c.h.b16 %v330
        %v591 = vunpack.c.l.b16 %v331
        %v592 = vunpack.c.h.b16 %v331
        %v593 = vunpack.c.l.b16 %v332
        %v594 = vunpack.c.h.b16 %v332
        %v595 = vunpack.c.l.b16 %v333
        %v596 = vunpack.c.h.b16 %v333
        %v597 = vunpack.c.l.b16 %v334
        %v598 = vunpack.c.h.b16 %v334
        %v599 = vunpack.c.l.b16 %v335
        %v600 = vunpack.c.h.b16 %v335
        %v601 = vunpack.c.l.b16 %v336
        %v602 = vunpack.c.h.b16 %v336
        %v603 = vunpack.c.l.b16 %v337
        %v604 = vunpack.c.h.b16 %v337
        %v605 = vunpack.c.l.b16 %v338
        %v606 = vunpack.c.h.b16 %v338
        %v607 = vunpack.c.l.b16 %v339
        %v608 = vunpack.c.h.b16 %v339
        %v609 = vunpack.c.l.b16 %v340
        %v610 = vunpack.c.h.b16 %v340
        %v611 = vunpack.c.l.b16 %v341
        %v612 = vunpack.c.h.b16 %v341
        %v613 = vunpack.c.l.b16 %v342
        %v614 = vunpack.c.h.b16 %v342
        %v615 = vunpack.c.l.b16 %v343
        %v616 = vunpack.c.h.b16 %v343
        %v617 = vunpack.c.l.b16 %v344
        %v618 = vunpack.c.h.b16 %v344
        %v619 = vunpack.c.l.b16 %v345
        %v620 = vunpack.c.h.b16 %v345
        %v621 = vunpack.c.l.b16 %v346
        %v622 = vunpack.c.h.b16 %v346
        %v623 = vunpack.c.l.b16 %v347
        %v624 = vunpack.c.h.b16 %v347
        %v625 = vunpack.c.l.b16 %v348
        %v626 = vunpack.c.h.b16 %v348
        %v627 = vunpack.c.l.b16 %v349
        %v628 = vunpack.c.h.b16 %v349
        %v629 = vunpack.c.l.b16 %v350
        %v630 = vunpack.c.h.b16 %v350
        %v631 = vunpack.c.l.b16 %v351
        %v632 = vunpack.c.h.b16 %v351
        %v633 = vunpack.c.l.b16 %v352
        %v634 = vunpack.c.h.b16 %v352
        %v635 = vunpack.c.l.b16 %v353
        %v636 = vunpack.c.h.b16 %v353
        %v637 = vunpack.c.l.b16 %v354
        %v638 = vunpack.c.h.b16 %v354
        %v639 = vunpack.c.l.b16 %v355
        %v640 = vunpack.c.h.b16 %v355
        %v641 = vunpack.c.l.b16 %v356
        %v642 = vunpack.c.h.b16 %v356
        %v643 = vunpack.c.l.b16 %v357
        %v644 = vunpack.c.h.b16 %v357
        %v645 = vunpack.c.l.b16 %v358
        %v646 = vunpack.c.h.b16 %v358
        %v647 = vunpack.c.l.b16 %v359
        %v648 = vunpack.c.h.b16 %v359
        %v649 = vunpack.c.l.b16 %v360
        %v650 = vunpack.c.h.b16 %v360
        %v651 = vunpack.c.l.b16 %v361
        %v652 = vunpack.c.h.b16 %v361
        %v653 = vunpack.c.l.b16 %v362
        %v654 = vunpack.c.h.b16 %v362
        %v655 = vunpack.c.l.b16 %v363
        %v656 = vunpack.c.h.b16 %v363
        %v657 = vunpack.c.l.b16 %v364
        %v658 = vunpack.c.h.b16 %v364
        %v659 = vunpack.c.l.b16 %v365
        %v660 = vunpack.c.h.b16 %v365
        %v661 = vunpack.c.l.b16 %v366
        %v662 = vunpack.c.h.b16 %v366
        %v663 = vunpack.c.l.b16 %v367
        %v664 = vunpack.c.h.b16 %v367
        %v665 = vunpack.c.l.b16 %v368
        %v666 = vunpack.c.h.b16 %v368
        %v667 = vunpack.c.l.b16 %v369
        %v668 = vunpack.c.h.b16 %v369
        %v669 = vunpack.c.l.b16 %v370
        %v670 = vunpack.c.h.b16 %v370
        %v671 = vunpack.c.l.b16 %v371
        %v672 = vunpack.c.h.b16 %v371
        %v673 = vunpack.c.l.b16 %v372
        %v674 = vunpack.c.h.b16 %v372
        %v675 = vunpack.c.l.b16 %v373
        %v676 = vunpack.c.h.b16 %v373
        %v677 = vunpack.c.l.b16 %v374
        %v678 = vunpack.c.h.b16 %v374
        %v679 = vunpack.c.l.b16 %v375
        %v680 = vunpack.c.h.b16 %v375
        %v681 = vunpack.c.l.b16 %v376
        %v682 = vunpack.c.h.b16 %v376
        %v683 = vunpack.c.l.b16 %v377
        %v684 = vunpack.c.h.b16 %v377
        %v685 = vunpack.c.l.b16 %v378
        %v686 = vunpack.c.h.b16 %v378
        %v687 = vunpack.c.l.b16 %v379
        %v688 = vunpack.c.h.b16 %v379
        %v689 = vunpack.c.l.b16 %v380
        %v690 = vunpack.c.h.b16 %v380
        %v691 = vunpack.c.l.b16 %v381
        %v692 = vunpack.c.h.b16 %v381
        %v693 = vunpack.c.l.b16 %v382
        %v694 = vunpack.c.h.b16 %v382
        %v695 = vunpack.c.l.b16 %v383
        %v696 = vunpack.c.h.b16 %v383
        %v697 = vunpack.c.l.b16 %v384
        %v698 = vunpack.c.h.b16 %v384
        %v699 = vunpack.c.l.b16 %v385
        %v700 = vunpack.c.h.b16 %v385
        %v701 = vunpack.c.l.b16 %v386
        %v702 = vunpack.c.h.b16 %v386
        %v703 = vunpack.c.l.b16 %v387
        %v704 = vunpack.c.h.b16 %v387
        %v705 = vunpack.c.l.b16 %v388
        %v706 = vunpack.c.h.b16 %v388
        %v707 = vunpack.c.l.b16 %v389
        %v708 = vunpack.c.h.b16 %v389
        %v709 = vunpack.c.l.b16 %v390
        %v710 = vunpack.c.h.b16 %v390
        %v711 = vunpack.c.l.b16 %v391
        %v712 = vunpack.c.h.b16 %v391
        %v713 = vunpack.c.l.b16 %v392
        %v714 = vunpack.c.h.b16 %v392
        %v715 = vunpack.c.l.b16 %v393
        %v716 = vunpack.c.h.b16 %v393
        %v717 = vunpack.c.l.b16 %v394
        %v718 = vunpack.c.h.b16 %v394
        %v719 = vunpack.c.l.b16 %v395
        %v720 = vunpack.c.h.b16 %v395
        %v721 = vunpack.c.l.b16 %v396
        %v722 = vunpack.c.h.b16 %v396
        %v723 = vunpack.c.l.b16 %v397
        %v724 = vunpack.c.h.b16 %v397
        %v725 = vunpack.c.l.b16 %v398
        %v726 = vunpack.c.h.b16 %v398
        %v727 = vunpack.c.l.b16 %v399
        %v728 = vunpack.c.h.b16 %v399
        %v729 = vunpack.c.l.b16 %v400
        %v730 = vunpack.c.h.b16 %v400
        %v731 = vunpack.c.l.b16 %v401
        %v732 = vunpack.c.h.b16 %v401
        %v733 = vunpack.c.l.b16 %v402
        %v734 = vunpack.c.h.b16 %v402
        %v735 = vunpack.c.l.b16 %v403
        %v736 = vunpack.c.h.b16 %v403
        %v737 = vunpack.c.l.b16 %v404
        %v738 = vunpack.c.h.b16 %v404
        %v739 = vunpack.c.l.b16 %v405
        %v740 = vunpack.c.h.b16 %v405
        %v741 = vunpack.c.l.b16 %v406
        %v742 = vunpack.c.h.b16 %v406
        %v743 = vunpack.c.l.b16 %v407
        %v744 = vunpack.c.h.b16 %v407
        %v745 = vunpack.c.l.b16 %v408
        %v746 = vunpack.c.h.b16 %v408
        %v747 = vunpack.c.l.b16 %v409
        %v748 = vunpack.c.h.b16 %v409
        %v749 = vunpack.c.l.b16 %v410
        %v750 = vunpack.c.h.b16 %v410
        %v751 = vunpack.c.l.b16 %v411
        %v752 = vunpack.c.h.b16 %v411
        %v753 = vunpack.c.l.b16 %v412
        %v754 = vunpack.c.h.b16 %v412
        %v755 = vunpack.c.l.b16 %v413
        %v756 = vunpack.c.h.b16 %v413
        %v757 = vunpack.c.l.b16 %v414
        %v758 = vunpack.c.h.b16 %v414
        %v759 = vunpack.c.l.b16 %v415
        %v760 = vunpack.c.h.b16 %v415
        %v761 = vunpack.c.l.b16 %v416
        %v762 = vunpack.c.h.b16 %v416
        %v763 = vunpack.c.l.b16 %v417
        %v764 = vunpack.c.h.b16 %v417
        %v765 = vunpack.c.l.b16 %v418
        %v766 = vunpack.c.h.b16 %v418
        %v767 = vunpack.c.l.b16 %v419
        %v768 = vunpack.c.h.b16 %v419
        %v769 = vunpack.c.l.b16 %v420
        %v770 = vunpack.c.h.b16 %v420
        %v771 = vunpack.c.l.b16 %v421
        %v772 = vunpack.c.h.b16 %v421
        %v773 = vunpack.c.l.b16 %v422
        %v774 = vunpack.c.h.b16 %v422
        %v775 = vunpack.c.l.b16 %v423
        %v776 = vunpack.c.h.b16 %v423
        %v777 = vunpack.c.l.b16 %v424
        %v778 = vunpack.c.h.b16 %v424
        %v779 = vunpack.c.l.b16 %v425
        %v780 = vunpack.c.h.b16 %v425
        %v781 = vunpack.c.l.b16 %v426
        %v782 = vunpack.c.h.b16 %v426
        %v783 = vunpack.c.l.b16 %v427
        %v784 = vunpack.c.h.b16 %v427
        %v785 = vunpack.c.l.b16 %v428
        %v786 = vunpack.c.h.b16 %v428
        %v787 = vunpack.c.l.b16 %v429
        %v788 = vunpack.c.h.b16 %v429
        %v789 = vunpack.c.l.b16 %v430
        %v790 = vunpack.c.h.b16 %v430
        %v791 = vunpack.c.l.b16 %v431
        %v792 = vunpack.c.h.b16 %v431
        %v793 = vunpack.c.l.b16 %v432
        %v794 = vunpack.c.h.b16 %v432
        %v795 = vunpack.c.l.b16 %v433
        %v796 = vunpack.c.h.b16 %v433
        %v797 = vunpack.c.l.b16 %v434
        %v798 = vunpack.c.h.b16 %v434
        %v799 = vunpack.c.l.b16 %v435
        %v800 = vunpack.c.h.b16 %v435
        %v801 = vunpack.c.l.b16 %v436
        %v802 = vunpack.c.h.b16 %v436
        %v803 = vunpack.c.l.b16 %v437
        %v804 = vunpack.c.h.b16 %v437
        %v805 = vunpack.c.l.b16 %v438
        %v806 = vunpack.c.h.b16 %v438
        %v807 = vunpack.c.l.b16 %v439
        %v808 = vunpack.c.h.b16 %v439
        %v809 = vunpack.c.l.b16 %v440
        %v810 = vunpack.c.h.b16 %v440
        %v811 = vunpack.c.l.b16 %v441
        %v812 = vunpack.c.h.b16 %v441
        %v813 = vunpack.c.l.b16 %v442
        %v814 = vunpack.c.h.b16 %v442
        %v815 = vunpack.c.l.b16 %v443
        %v816 = vunpack.c.h.b16 %v443
        %v817 = vunpack.c.l.b16 %v444
        %v818 = vunpack.c.h.b16 %v444
        %v819 = vunpack.c.l.b16 %v445
        %v820 = vunpack.c.h.b16 %v445
        %v821 = vunpack.c.l.b16 %v446
        %v822 = vunpack.c.h.b16 %v446
        %v823 = vunpack.c.l.b16 %v447
        %v824 = vunpack.c.h.b16 %v447
        %v825 = vunpack.c.l.b16 %v448
        %v826 = vunpack.c.h.b16 %v448
        %v827 = vunpack.c.l.b16 %v449
        %v828 = vunpack.c.h.b16 %v449
        %v829 = vunpack.c.l.b16 %v450
        %v830 = vunpack.c.h.b16 %v450
        %v831 = vunpack.c.l.b16 %v451
        %v832 = vunpack.c.h.b16 %v451
        %v833 = vunpack.c.l.b16 %v452
        %v834 = vunpack.c.h.b16 %v452
        %v835 = vunpack.c.l.b16 %v453
        %v836 = vunpack.c.h.b16 %v453
        %v837 = vunpack.c.l.b16 %v454
        %v838 = vunpack.c.h.b16 %v454
        %v839 = vpack.c.b16 %v587, %v583
        %v840 = vpack.c.b16 %v588, %v584
        %v841 = vpack.c.b16 %v589, %v585
        %v842 = vpack.c.b16 %v590, %v586
        %v843 = vpack.c.b16 %v595, %v591
        %v844 = vpack.c.b16 %v596, %v592
        %v845 = vpack.c.b16 %v597, %v593
        %v846 = vpack.c.b16 %v598, %v594
        %v847 = vpack.c.b16 %v603, %v599
        %v848 = vpack.c.b16 %v604, %v600
        %v849 = vpack.c.b16 %v605, %v601
        %v850 = vpack.c.b16 %v606, %v602
        %v851 = vpack.c.b16 %v611, %v607
        %v852 = vpack.c.b16 %v612, %v608
        %v853 = vpack.c.b16 %v613, %v609
        %v854 = vpack.c.b16 %v614, %v610
        %v855 = vpack.c.b16 %v619, %v615
        %v856 = vpack.c.b16 %v620, %v616
        %v857 = vpack.c.b16 %v621, %v617
        %v858 = vpack.c.b16 %v622, %v618
        %v859 = vpack.c.b16 %v627, %v623
        %v860 = vpack.c.b16 %v628, %v624
        %v861 = vpack.c.b16 %v629, %v625
        %v862 = vpack.c.b16 %v630, %v626
        %v863 = vpack.c.b16 %v635, %v631
        %v864 = vpack.c.b16 %v636, %v632
        %v865 = vpack.c.b16 %v637, %v633
        %v866 = vpack.c.b16 %v638, %v634
        %v867 = vpack.c.b16 %v643, %v639
        %v868 = vpack.c.b16 %v644, %v640
        %v869 = vpack.c.b16 %v645, %v641
        %v870 = vpack.c.b16 %v646, %v642
        %v871 = vpack.c.b16 %v651, %v647
        %v872 = vpack.c.b16 %v652, %v648
        %v873 = vpack.c.b16 %v653, %v649
        %v874 = vpack.c.b16 %v654, %v650
        %v875 = vpack.c.b16 %v659, %v655
        %v876 = vpack.c.b16 %v660, %v656
        %v877 = vpack.c.b16 %v661, %v657
        %v878 = vpack.c.b16 %v662, %v658
        %v879 = vpack.c.b16 %v667, %v663
        %v880 = vpack.c.b16 %v668, %v664
        %v881 = vpack.c.b16 %v669, %v665
        %v882 = vpack.c.b16 %v670, %v666
        %v883 = vpack.c.b16 %v675, %v671
        %v884 = vpack.c.b16 %v676, %v672
        %v885 = vpack.c.b16 %v677, %v673
        %v886 = vpack.c.b16 %v678, %v674
        %v887 = vpack.c.b16 %v683, %v679
        %v888 = vpack.c.b16 %v684, %v680
        %v889 = vpack.c.b16 %v685, %v681
        %v890 = vpack.c.b16 %v686, %v682
        %v891 = vpack.c.b16 %v691, %v687
        %v892 = vpack.c.b16 %v692, %v688
        %v893 = vpack.c.b16 %v693, %v689
        %v894 = vpack.c.b16 %v694, %v690
        %v895 = vpack.c.b16 %v699, %v695
        %v896 = vpack.c.b16 %v700, %v696
        %v897 = vpack.c.b16 %v701, %v697
        %v898 = vpack.c.b16 %v702, %v698
        %v899 = vpack.c.b16 %v707, %v703
        %v900 = vpack.c.b16 %v708, %v704
        %v901 = vpack.c.b16 %v709, %v705
        %v902 = vpack.c.b16 %v710, %v706
        %v903 = vpack.c.b16 %v715, %v711
        %v904 = vpack.c.b16 %v716, %v712
        %v905 = vpack.c.b16 %v717, %v713
        %v906 = vpack.c.b16 %v718, %v714
        %v907 = vpack.c.b16 %v723, %v719
        %v908 = vpack.c.b16 %v724, %v720
        %v909 = vpack.c.b16 %v725, %v721
        %v910 = vpack.c.b16 %v726, %v722
        %v911 = vpack.c.b16 %v731, %v727
        %v912 = vpack.c.b16 %v732, %v728
        %v913 = vpack.c.b16 %v733, %v729
        %v914 = vpack.c.b16 %v734, %v730
        %v915 = vpack.c.b16 %v739, %v735
        %v916 = vpack.c.b16 %v740, %v736
        %v917 = vpack.c.b16 %v741, %v737
        %v918 = vpack.c.b16 %v742, %v738
        %v919 = vpack.c.b16 %v747, %v743
        %v920 = vpack.c.b16 %v748, %v744
        %v921 = vpack.c.b16 %v749, %v745
        %v922 = vpack.c.b16 %v750, %v746
        %v923 = vpack.c.b16 %v755, %v751
        %v924 = vpack.c.b16 %v756, %v752
        %v925 = vpack.c.b16 %v757, %v753
        %v926 = vpack.c.b16 %v758, %v754
        %v927 = vpack.c.b16 %v763, %v759
        %v928 = vpack.c.b16 %v764, %v760
        %v929 = vpack.c.b16 %v765, %v761
        %v930 = vpack.c.b16 %v766, %v762
        %v931 = vpack.c.b16 %v771, %v767
        %v932 = vpack.c.b16 %v772, %v768
        %v933 = vpack.c.b16 %v773, %v769
        %v934 = vpack.c.b16 %v774, %v770
        %v935 = vpack.c.b16 %v779, %v775
        %v936 = vpack.c.b16 %v780, %v776
        %v937 = vpack.c.b16 %v781, %v777
        %v938 = vpack.c.b16 %v782, %v778
        %v939 = vpack.c.b16 %v787, %v783
        %v940 = vpack.c.b16 %v788, %v784
        %v941 = vpack.c.b16 %v789, %v785
        %v942 = vpack.c.b16 %v790, %v786
        %v943 = vpack.c.b16 %v795, %v791
        %v944 = vpack.c.b16 %v796, %v792
        %v945 = vpack.c.b16 %v797, %v793
        %v946 = vpack.c.b16 %v798, %v794
        %v947 = vpack.c.b16 %v803, %v799
        %v948 = vpack.c.b16 %v804, %v800
        %v949 = vpack.c.b16 %v805, %v801
        %v950 = vpack.c.b16 %v806, %v802
        %v951 = vpack.c.b16 %v811, %v807
        %v952 = vpack.c.b16 %v812, %v808
        %v953 = vpack.c.b16 %v813, %v809
        %v954 = vpack.c.b16 %v814, %v810
        %v955 = vpack.c.b16 %v819, %v815
        %v956 = vpack.c.b16 %v820, %v816
        %v957 = vpack.c.b16 %v821, %v817
        %v958 = vpack.c.b16 %v822, %v818
        %v959 = vpack.c.b16 %v827, %v823
        %v960 = vpack.c.b16 %v828, %v824
        %v961 = vpack.c.b16 %v829, %v825
        %v962 = vpack.c.b16 %v830, %v826
        %v963 = vpack.c.b16 %v835, %v831
        %v964 = vpack.c.b16 %v836, %v832
        %v965 = vpack.c.b16 %v837, %v833
        %v966 = vpack.c.b16 %v838, %v834
        %1095 = vmatprep.subr.bf16.mxu0 %v868
        %1096 = vmatpush1.bf16.msra.mxu0 %v867
        %1097 = vmatprep.subr.bf16.mxu0 %v864
        %1098 = vmatpush1.bf16.msra.mxu0 %v863
        %1099 = vmatprep.subr.bf16.mxu0 %v860
        %1100 = vmatpush1.bf16.msra.mxu0 %v859
        %1101 = vmatprep.subr.bf16.mxu0 %v856
        %1102 = vmatpush1.bf16.msra.mxu0 %v855
        %1103 = vmatprep.subr.bf16.mxu0 %v852
        %1104 = vmatpush1.bf16.msra.mxu0 %v851
        %1105 = vmatprep.subr.bf16.mxu0 %v848
        %1106 = vmatpush1.bf16.msra.mxu0 %v847
        %1107 = vmatprep.subr.bf16.mxu0 %v844
        %1108 = vmatpush1.bf16.msra.mxu0 %v843
        %1109 = vmatprep.subr.bf16.mxu0 %v840
        %1110 = vmatpush1.bf16.msra.mxu0 %v839
        %1111 = vmatprep.subr.bf16.mxu0 %v900
        %1112 = vmatpush2.bf16.msra.mxu0 %v899
        %1113 = vmatprep.subr.bf16.mxu0 %v896
        %1114 = vmatpush2.bf16.msra.mxu0 %v895
        %1115 = vmatprep.subr.bf16.mxu0 %v892
        %1116 = vmatpush2.bf16.msra.mxu0 %v891
        %1117 = vmatprep.subr.bf16.mxu0 %v888
        %1118 = vmatpush2.bf16.msra.mxu0 %v887
        %1119 = vmatprep.subr.bf16.mxu0 %v884
        %1120 = vmatpush2.bf16.msra.mxu0 %v883
        %1121 = vmatprep.subr.bf16.mxu0 %v880
        %1122 = vmatpush2.bf16.msra.mxu0 %v879
        %1123 = vmatprep.subr.bf16.mxu0 %v876
        %1124 = vmatpush2.bf16.msra.mxu0 %v875
        %1125 = vmatprep.subr.bf16.mxu0 %v872
        %1126 = vmatpush2.bf16.msra.mxu0 %v871
        %1127 = vmatprep.mubr.bf16.mxu0 %v324
        %1128 = vmatmul.mubr.bf16.gmra.mxu0 %v323
        %v1129 = vpop.f32.mrf.mxu0
        %v1130 = vadd.f32 0.0, %v1129
        %v1131 = vpop.f32.mrf.mxu0
        %v1132 = vadd.f32 0.0, %v1131
        %v1133 = vpop.f32.mrf.mxu0
        %v1134 = vpop.f32.mrf.mxu0
        %1135 = vdwg.mxu0
        %1136 = vmatprep.subr.bf16.mxu0 %v932
        %1137 = vmatpush1.bf16.msra.mxu0 %v931
        %1138 = vmatprep.subr.bf16.mxu0 %v928
        %1139 = vmatpush1.bf16.msra.mxu0 %v927
        %1140 = vmatprep.subr.bf16.mxu0 %v924
        %1141 = vmatpush1.bf16.msra.mxu0 %v923
        %1142 = vmatprep.subr.bf16.mxu0 %v920
        %1143 = vmatpush1.bf16.msra.mxu0 %v919
        %1144 = vmatprep.subr.bf16.mxu0 %v916
        %1145 = vmatpush1.bf16.msra.mxu0 %v915
        %1146 = vmatprep.subr.bf16.mxu0 %v912
        %1147 = vmatpush1.bf16.msra.mxu0 %v911
        %1148 = vmatprep.subr.bf16.mxu0 %v908
        %1149 = vmatpush1.bf16.msra.mxu0 %v907
        %1150 = vmatprep.subr.bf16.mxu0 %v904
        %1151 = vmatpush1.bf16.msra.mxu0 %v903
        %1152 = vmatprep.subr.bf16.mxu0 %v964
        %1153 = vmatpush2.bf16.msra.mxu0 %v963
        %1154 = vmatprep.subr.bf16.mxu0 %v960
        %1155 = vmatpush2.bf16.msra.mxu0 %v959
        %1156 = vmatprep.subr.bf16.mxu0 %v956
        %1157 = vmatpush2.bf16.msra.mxu0 %v955
        %1158 = vmatprep.subr.bf16.mxu0 %v952
        %1159 = vmatpush2.bf16.msra.mxu0 %v951
        %1160 = vmatprep.subr.bf16.mxu0 %v948
        %1161 = vmatpush2.bf16.msra.mxu0 %v947
        %1162 = vmatprep.subr.bf16.mxu0 %v944
        %1163 = vmatpush2.bf16.msra.mxu0 %v943
        %1164 = vmatprep.subr.bf16.mxu0 %v940
        %1165 = vmatpush2.bf16.msra.mxu0 %v939
        %1166 = vmatprep.subr.bf16.mxu0 %v936
        %1167 = vmatpush2.bf16.msra.mxu0 %v935
        %1168 = vmatprep.mubr.bf16.mxu0 %v326
        %1169 = vmatmul.mubr.bf16.gmra.mxu0 %v325
        %v1170 = vpop.f32.mrf.mxu0
        %v1171 = vadd.f32 %v1130, %v1170
        %v1172 = vpop.f32.mrf.mxu0
        %v1173 = vadd.f32 %v1132, %v1172
        %v1174 = vpop.f32.mrf.mxu0
        %v1175 = vpop.f32.mrf.mxu0
        %1176 = vdwg.mxu0
        %1177 = vmatprep.subr.bf16.mxu0 %v870
        %1178 = vmatpush1.bf16.msra.mxu0 %v869
        %1179 = vmatprep.subr.bf16.mxu0 %v866
        %1180 = vmatpush1.bf16.msra.mxu0 %v865
        %1181 = vmatprep.subr.bf16.mxu0 %v862
        %1182 = vmatpush1.bf16.msra.mxu0 %v861
        %1183 = vmatprep.subr.bf16.mxu0 %v858
        %1184 = vmatpush1.bf16.msra.mxu0 %v857
        %1185 = vmatprep.subr.bf16.mxu0 %v854
        %1186 = vmatpush1.bf16.msra.mxu0 %v853
        %1187 = vmatprep.subr.bf16.mxu0 %v850
        %1188 = vmatpush1.bf16.msra.mxu0 %v849
        %1189 = vmatprep.subr.bf16.mxu0 %v846
        %1190 = vmatpush1.bf16.msra.mxu0 %v845
        %1191 = vmatprep.subr.bf16.mxu0 %v842
        %1192 = vmatpush1.bf16.msra.mxu0 %v841
        %1193 = vmatprep.subr.bf16.mxu0 %v902
        %1194 = vmatpush2.bf16.msra.mxu0 %v901
        %1195 = vmatprep.subr.bf16.mxu0 %v898
        %1196 = vmatpush2.bf16.msra.mxu0 %v897
        %1197 = vmatprep.subr.bf16.mxu0 %v894
        %1198 = vmatpush2.bf16.msra.mxu0 %v893
        %1199 = vmatprep.subr.bf16.mxu0 %v890
        %1200 = vmatpush2.bf16.msra.mxu0 %v889
        %1201 = vmatprep.subr.bf16.mxu0 %v886
        %1202 = vmatpush2.bf16.msra.mxu0 %v885
        %1203 = vmatprep.subr.bf16.mxu0 %v882
        %1204 = vmatpush2.bf16.msra.mxu0 %v881
        %1205 = vmatprep.subr.bf16.mxu0 %v878
        %1206 = vmatpush2.bf16.msra.mxu0 %v877
        %1207 = vmatprep.subr.bf16.mxu0 %v874
        %1208 = vmatpush2.bf16.msra.mxu0 %v873
        %1209 = vmatprep.mubr.bf16.mxu0 %v324
        %1210 = vmatmul.mubr.bf16.gmra.mxu0 %v323
        %v1211 = vpop.f32.mrf.mxu0
        %v1212 = vadd.f32 0.0, %v1211
        %v1213 = vpop.f32.mrf.mxu0
        %v1214 = vadd.f32 0.0, %v1213
        %v1215 = vpop.f32.mrf.mxu0
        %v1216 = vpop.f32.mrf.mxu0
        %1217 = vdwg.mxu0
        %1218 = vmatprep.subr.bf16.mxu0 %v934
        %1219 = vmatpush1.bf16.msra.mxu0 %v933
        %1220 = vmatprep.subr.bf16.mxu0 %v930
        %1221 = vmatpush1.bf16.msra.mxu0 %v929
        %1222 = vmatprep.subr.bf16.mxu0 %v926
        %1223 = vmatpush1.bf16.msra.mxu0 %v925
        %1224 = vmatprep.subr.bf16.mxu0 %v922
        %1225 = vmatpush1.bf16.msra.mxu0 %v921
        %1226 = vmatprep.subr.bf16.mxu0 %v918
        %1227 = vmatpush1.bf16.msra.mxu0 %v917
        %1228 = vmatprep.subr.bf16.mxu0 %v914
        %1229 = vmatpush1.bf16.msra.mxu0 %v913
        %1230 = vmatprep.subr.bf16.mxu0 %v910
        %1231 = vmatpush1.bf16.msra.mxu0 %v909
        %1232 = vmatprep.subr.bf16.mxu0 %v906
        %1233 = vmatpush1.bf16.msra.mxu0 %v905
        %1234 = vmatprep.subr.bf16.mxu0 %v966
        %1235 = vmatpush2.bf16.msra.mxu0 %v965
        %1236 = vmatprep.subr.bf16.mxu0 %v962
        %1237 = vmatpush2.bf16.msra.mxu0 %v961
        %1238 = vmatprep.subr.bf16.mxu0 %v958
        %1239 = vmatpush2.bf16.msra.mxu0 %v957
        %1240 = vmatprep.subr.bf16.mxu0 %v954
        %1241 = vmatpush2.bf16.msra.mxu0 %v953
        %1242 = vmatprep.subr.bf16.mxu0 %v950
        %1243 = vmatpush2.bf16.msra.mxu0 %v949
        %1244 = vmatprep.subr.bf16.mxu0 %v946
        %1245 = vmatpush2.bf16.msra.mxu0 %v945
        %1246 = vmatprep.subr.bf16.mxu0 %v942
        %1247 = vmatpush2.bf16.msra.mxu0 %v941
        %1248 = vmatprep.subr.bf16.mxu0 %v938
        %1249 = vmatpush2.bf16.msra.mxu0 %v937
        %1250 = vmatprep.mubr.bf16.mxu0 %v326
        %1251 = vmatmul.mubr.bf16.gmra.mxu0 %v325
        %v1252 = vpop.f32.mrf.mxu0
        %v1253 = vadd.f32 %v1212, %v1252
        %v1254 = vpop.f32.mrf.mxu0
        %v1255 = vadd.f32 %v1214, %v1254
        %v1256 = vpop.f32.mrf.mxu0
        %v1257 = vpop.f32.mrf.mxu0
        %1258 = vdwg.mxu0
        %v1259 = vld [vmem:[%s271] sm:$0xff]
        %v1260 = vrot.slane %v1171, 4
        %v1261 = vadd.f32 %v1171, %v1260
        %v1262 = vrot.slane %v1261, 2
        %v1263 = vadd.f32 %v1261, %v1262
        %v1264 = vrot.slane %v1263, 1
        %v1265 = vadd.f32 %v1263, %v1264
        %v1266 = vrot.slane %v1173, 4
        %v1267 = vadd.f32 %v1173, %v1266
        %v1268 = vrot.slane %v1267, 2
        %v1269 = vadd.f32 %v1267, %v1268
        %v1270 = vrot.slane %v1269, 1
        %v1271 = vadd.f32 %v1269, %v1270
        %v1272 = vrot.slane %v1253, 4
        %v1273 = vadd.f32 %v1253, %v1272
        %v1274 = vrot.slane %v1273, 2
        %v1275 = vadd.f32 %v1273, %v1274
        %v1276 = vrot.slane %v1275, 1
        %v1277 = vadd.f32 %v1275, %v1276
        %v1278 = vrot.slane %v1255, 4
        %v1279 = vadd.f32 %v1255, %v1278
        %v1280 = vrot.slane %v1279, 2
        %v1281 = vadd.f32 %v1279, %v1280
        %v1282 = vrot.slane %v1281, 1
        %v1283 = vadd.f32 %v1281, %v1282
        %v1284 = vrcp.pop 8.0
        %v1285 = vmul.f32 %v1265, %v1284
        %v1286 = vmul.f32 %v1271, %v1284
        %v1287 = vmul.f32 %v1277, %v1284
        %v1288 = vmul.f32 %v1283, %v1284
        %v1289 = vsub.f32 %v1171, %v1285
        %v1290 = vsub.f32 %v1173, %v1286
        %v1291 = vsub.f32 %v1253, %v1287
        %v1292 = vsub.f32 %v1255, %v1288
        %v1293 = vmul.f32 %v1289, %v1289
        %v1294 = vmul.f32 %v1290, %v1290
        %v1295 = vmul.f32 %v1291, %v1291
        %v1296 = vmul.f32 %v1292, %v1292
        %v1297 = vrot.slane %v1293, 4
        %v1298 = vadd.f32 %v1293, %v1297
        %v1299 = vrot.slane %v1298, 2
        %v1300 = vadd.f32 %v1298, %v1299
        %v1301 = vrot.slane %v1300, 1
        %v1302 = vadd.f32 %v1300, %v1301
        %v1303 = vrot.slane %v1294, 4
        %v1304 = vadd.f32 %v1294, %v1303
        %v1305 = vrot.slane %v1304, 2
        %v1306 = vadd.f32 %v1304, %v1305
        %v1307 = vrot.slane %v1306, 1
        %v1308 = vadd.f32 %v1306, %v1307
        %v1309 = vrot.slane %v1295, 4
        %v1310 = vadd.f32 %v1295, %v1309
        %v1311 = vrot.slane %v1310, 2
        %v1312 = vadd.f32 %v1310, %v1311
        %v1313 = vrot.slane %v1312, 1
        %v1314 = vadd.f32 %v1312, %v1313
        %v1315 = vrot.slane %v1296, 4
        %v1316 = vadd.f32 %v1296, %v1315
        %v1317 = vrot.slane %v1316, 2
        %v1318 = vadd.f32 %v1316, %v1317
        %v1319 = vrot.slane %v1318, 1
        %v1320 = vadd.f32 %v1318, %v1319
        %v1321 = vmul.f32 %v1302, %v1284
        %v1322 = vmul.f32 %v1308, %v1284
        %v1323 = vmul.f32 %v1314, %v1284
        %v1324 = vmul.f32 %v1320, %v1284
        %v1325 = vadd.f32 %v1321, 1e-05
        %v1326 = vadd.f32 %v1322, 1e-05
        %v1327 = vadd.f32 %v1323, 1e-05
        %v1328 = vadd.f32 %v1324, 1e-05
        %v1329 = vrsqrt.pop %v1325
        %v1330 = vrsqrt.pop %v1326
        %v1331 = vrsqrt.pop %v1327
        %v1332 = vrsqrt.pop %v1328
        %v1337 = vcombine.low %v1329, %v1330
        %v1338 = vcombine.low %v1331, %v1332
        %v1340 = vunpack.c.l.s4 1983009808
        %v1341 = vunpack.c.0.s8 %v1340
        %v1342 = vlaneseq
        %v1343 = vshrl.u32 %v1342, 7
        %v1344 = vsub.s32 %v1341, %v1343
        %v1345 = vrot.slane %v1337, %v1344
        %v1347 = vunpack.c.l.s4 1983009808
        %v1348 = vunpack.c.0.s8 %v1347
        %v1349 = vlaneseq
        %v1350 = vshrl.u32 %v1349, 7
        %v1351 = vsub.s32 %v1348, %v1350
        %v1352 = vrot.slane %v1338, %v1351
        %v1353 = vcombine.low %v1345, %v1352
        %v1355 = vmul.f32 %v1259, %v1353
        %v1357 = vlaneseq
        %v1358 = vshrl.u32 %v1357, 7
        %v1359 = vsub.s32 0, %v1358
        %v1360 = vrot.slane %v1355, %v1359
        %v1361 = vlaneseq
        %v1362 = vshrl.u32 %v1361, 7
        %v1363 = vsub.s32 2, %v1362
        %v1364 = vrot.slane %v1355, %v1363
        %v1365 = vlaneseq
        %v1366 = vshrl.u32 %v1365, 7
        %v1367 = vsub.s32 4, %v1366
        %v1368 = vrot.slane %v1355, %v1367
        %v1369 = vlaneseq
        %v1370 = vshrl.u32 %v1369, 7
        %v1371 = vsub.s32 6, %v1370
        %v1372 = vrot.slane %v1355, %v1371
        %v1377 = vlaneseq
        %v1378 = vshrl.u32 %v1377, 7
        %v1379 = vsub.s32 0, %v1378
        %v1380 = vrot.slane %v1360, %v1379
        %v1381 = vlaneseq
        %v1382 = vshrl.u32 %v1381, 7
        %v1383 = vsub.s32 0, %v1382
        %v1384 = vrot.slane %v1364, %v1383
        %v1385 = vlaneseq
        %v1386 = vshrl.u32 %v1385, 7
        %v1387 = vsub.s32 0, %v1386
        %v1388 = vrot.slane %v1368, %v1387
        %v1389 = vlaneseq
        %v1390 = vshrl.u32 %v1389, 7
        %v1391 = vsub.s32 0, %v1390
        %v1392 = vrot.slane %v1372, %v1391
        %v1393 = vmul.f32 %v1289, %v1380
        %v1394 = vmul.f32 %v1290, %v1384
        %v1395 = vmul.f32 %v1291, %v1388
        %v1396 = vmul.f32 %v1292, %v1392
        %v1398 = vlaneseq
        %v1399 = vshrl.u32 %v1398, 7
        %v1400 = vsub.s32 1, %v1399
        %v1401 = vrot.slane %v1259, %v1400
        %v1402 = vlaneseq
        %v1403 = vshrl.u32 %v1402, 7
        %v1404 = vsub.s32 3, %v1403
        %v1405 = vrot.slane %v1259, %v1404
        %v1406 = vlaneseq
        %v1407 = vshrl.u32 %v1406, 7
        %v1408 = vsub.s32 5, %v1407
        %v1409 = vrot.slane %v1259, %v1408
        %v1410 = vlaneseq
        %v1411 = vshrl.u32 %v1410, 7
        %v1412 = vsub.s32 7, %v1411
        %v1413 = vrot.slane %v1259, %v1412
        %v1418 = vlaneseq
        %v1419 = vshrl.u32 %v1418, 7
        %v1420 = vsub.s32 1, %v1419
        %v1421 = vrot.slane %v1401, %v1420
        %v1422 = vlaneseq
        %v1423 = vshrl.u32 %v1422, 7
        %v1424 = vsub.s32 1, %v1423
        %v1425 = vrot.slane %v1405, %v1424
        %v1426 = vlaneseq
        %v1427 = vshrl.u32 %v1426, 7
        %v1428 = vsub.s32 1, %v1427
        %v1429 = vrot.slane %v1409, %v1428
        %v1430 = vlaneseq
        %v1431 = vshrl.u32 %v1430, 7
        %v1432 = vsub.s32 1, %v1431
        %v1433 = vrot.slane %v1413, %v1432
        %v1434 = vadd.f32 %v1393, %v1421
        %v1435 = vadd.f32 %v1394, %v1425
        %v1436 = vadd.f32 %v1395, %v1429
        %v1437 = vadd.f32 %v1396, %v1433
        %v1438 = vmax.f32 %v1434, 0.0
        %v1439 = vmax.f32 %v1435, 0.0
        %v1440 = vmax.f32 %v1436, 0.0
        %v1441 = vmax.f32 %v1437, 0.0
        %1442 = vst [vmem:[#allocation2] sm:$0xff] %v1438
        %1443 = vst [vmem:[#allocation2 + $0x8] sm:$0xff] %v1439
        %1444 = vst [vmem:[#allocation2 + $0x10] sm:$0xff] %v1440
        %1445 = vst [vmem:[#allocation2 + $0x18] sm:$0xff] %v1441
        %p1446 = scmp.eq.s32.totalorder %s22, 3
        // Predicated region
        $region65: #{tpu_custom_call.1} parent=39 // pred_check
          %p1447 = pneg %p1446
        $region66: #{tpu_custom_call.1} parent=39 // pred_check_branch
          %1449 = sbr.rel (%p1447) target = $region68
        $region67: #{tpu_custom_call.1} parent=39 // pred_region
          %v1450 = vpack.c.bf16 %v1438, %v1438
          %v1451 = vpack.c.bf16 %v1439, %v1439
          %v1452 = vpack.c.bf16 %v1440, %v1440
          %v1453 = vpack.c.bf16 %v1441, %v1441
          %v1454 = vld [vmem:[#allocation9] sm:$0xf]
          %v1455 = vld [vmem:[#allocation9 + $0x4] sm:$0xf]
          %v1456 = vld [vmem:[#allocation9 + $0x8] sm:$0xf]
          %v1457 = vld [vmem:[#allocation9 + $0xc] sm:$0xf]
          %v1458 = vld [vmem:[#allocation9 + $0x10] sm:$0xf]
          %v1459 = vld [vmem:[#allocation9 + $0x14] sm:$0xf]
          %v1460 = vld [vmem:[#allocation9 + $0x18] sm:$0xf]
          %v1461 = vld [vmem:[#allocation9 + $0x1c] sm:$0xf]
          %v1462 = vld [vmem:[#allocation9 + $0x20] sm:$0xf]
          %v1463 = vld [vmem:[#allocation9 + $0x24] sm:$0xf]
          %v1464 = vld [vmem:[#allocation9 + $0x28] sm:$0xf]
          %v1465 = vld [vmem:[#allocation9 + $0x2c] sm:$0xf]
          %v1466 = vld [vmem:[#allocation9 + $0x30] sm:$0xf]
          %v1467 = vld [vmem:[#allocation9 + $0x34] sm:$0xf]
          %v1468 = vld [vmem:[#allocation9 + $0x38] sm:$0xf]
          %v1469 = vld [vmem:[#allocation9 + $0x3c] sm:$0xf]
          %v1470 = vld [vmem:[#allocation9 + $0x40] sm:$0xf]
          %v1471 = vld [vmem:[#allocation9 + $0x44] sm:$0xf]
          %v1472 = vld [vmem:[#allocation9 + $0x48] sm:$0xf]
          %v1473 = vld [vmem:[#allocation9 + $0x4c] sm:$0xf]
          %v1474 = vld [vmem:[#allocation9 + $0x50] sm:$0xf]
          %v1475 = vld [vmem:[#allocation9 + $0x54] sm:$0xf]
          %v1476 = vld [vmem:[#allocation9 + $0x58] sm:$0xf]
          %v1477 = vld [vmem:[#allocation9 + $0x5c] sm:$0xf]
          %v1478 = vld [vmem:[#allocation9 + $0x60] sm:$0xf]
          %v1479 = vld [vmem:[#allocation9 + $0x64] sm:$0xf]
          %v1480 = vld [vmem:[#allocation9 + $0x68] sm:$0xf]
          %v1481 = vld [vmem:[#allocation9 + $0x6c] sm:$0xf]
          %v1482 = vld [vmem:[#allocation9 + $0x70] sm:$0xf]
          %v1483 = vld [vmem:[#allocation9 + $0x74] sm:$0xf]
          %v1484 = vld [vmem:[#allocation9 + $0x78] sm:$0xf]
          %v1485 = vld [vmem:[#allocation9 + $0x7c] sm:$0xf]
          %v1486 = vld [vmem:[#allocation9 + $0x80] sm:$0xf]
          %v1487 = vld [vmem:[#allocation9 + $0x84] sm:$0xf]
          %v1488 = vld [vmem:[#allocation9 + $0x88] sm:$0xf]
          %v1489 = vld [vmem:[#allocation9 + $0x8c] sm:$0xf]
          %v1490 = vld [vmem:[#allocation9 + $0x90] sm:$0xf]
          %v1491 = vld [vmem:[#allocation9 + $0x94] sm:$0xf]
          %v1492 = vld [vmem:[#allocation9 + $0x98] sm:$0xf]
          %v1493 = vld [vmem:[#allocation9 + $0x9c] sm:$0xf]
          %v1494 = vld [vmem:[#allocation9 + $0xa0] sm:$0xf]
          %v1495 = vld [vmem:[#allocation9 + $0xa4] sm:$0xf]
          %v1496 = vld [vmem:[#allocation9 + $0xa8] sm:$0xf]
          %v1497 = vld [vmem:[#allocation9 + $0xac] sm:$0xf]
          %v1498 = vld [vmem:[#allocation9 + $0xb0] sm:$0xf]
          %v1499 = vld [vmem:[#allocation9 + $0xb4] sm:$0xf]
          %v1500 = vld [vmem:[#allocation9 + $0xb8] sm:$0xf]
          %v1501 = vld [vmem:[#allocation9 + $0xbc] sm:$0xf]
          %v1502 = vld [vmem:[#allocation9 + $0xc0] sm:$0xf]
          %v1503 = vld [vmem:[#allocation9 + $0xc4] sm:$0xf]
          %v1504 = vld [vmem:[#allocation9 + $0xc8] sm:$0xf]
          %v1505 = vld [vmem:[#allocation9 + $0xcc] sm:$0xf]
          %v1506 = vld [vmem:[#allocation9 + $0xd0] sm:$0xf]
          %v1507 = vld [vmem:[#allocation9 + $0xd4] sm:$0xf]
          %v1508 = vld [vmem:[#allocation9 + $0xd8] sm:$0xf]
          %v1509 = vld [vmem:[#allocation9 + $0xdc] sm:$0xf]
          %v1510 = vld [vmem:[#allocation9 + $0xe0] sm:$0xf]
          %v1511 = vld [vmem:[#allocation9 + $0xe4] sm:$0xf]
          %v1512 = vld [vmem:[#allocation9 + $0xe8] sm:$0xf]
          %v1513 = vld [vmem:[#allocation9 + $0xec] sm:$0xf]
          %v1514 = vld [vmem:[#allocation9 + $0xf0] sm:$0xf]
          %v1515 = vld [vmem:[#allocation9 + $0xf4] sm:$0xf]
          %v1516 = vld [vmem:[#allocation9 + $0xf8] sm:$0xf]
          %v1517 = vld [vmem:[#allocation9 + $0xfc] sm:$0xf]
          %v1518 = vld [vmem:[#allocation11] sm:$0x1]
          %v1520 = vlaneseq
          %v1521 = vshrl.u32 %v1520, 7
          %v1522 = vsub.s32 0, %v1521
          %v1523 = vrot.slane %v1518, %v1522
          %v1589 = vunpack.c.l.b16 %v1454
          %v1590 = vunpack.c.l.b16 %v1455
          %v1591 = vunpack.c.l.b16 %v1456
          %v1592 = vunpack.c.l.b16 %v1457
          %v1593 = vunpack.c.l.b16 %v1458
          %v1594 = vunpack.c.l.b16 %v1459
          %v1595 = vunpack.c.l.b16 %v1460
          %v1596 = vunpack.c.l.b16 %v1461
          %v1597 = vunpack.c.l.b16 %v1462
          %v1598 = vunpack.c.l.b16 %v1463
          %v1599 = vunpack.c.l.b16 %v1464
          %v1600 = vunpack.c.l.b16 %v1465
          %v1601 = vunpack.c.l.b16 %v1466
          %v1602 = vunpack.c.l.b16 %v1467
          %v1603 = vunpack.c.l.b16 %v1468
          %v1604 = vunpack.c.l.b16 %v1469
          %v1605 = vunpack.c.l.b16 %v1470
          %v1606 = vunpack.c.l.b16 %v1471
          %v1607 = vunpack.c.l.b16 %v1472
          %v1608 = vunpack.c.l.b16 %v1473
          %v1609 = vunpack.c.l.b16 %v1474
          %v1610 = vunpack.c.l.b16 %v1475
          %v1611 = vunpack.c.l.b16 %v1476
          %v1612 = vunpack.c.l.b16 %v1477
          %v1613 = vunpack.c.l.b16 %v1478
          %v1614 = vunpack.c.l.b16 %v1479
          %v1615 = vunpack.c.l.b16 %v1480
          %v1616 = vunpack.c.l.b16 %v1481
          %v1617 = vunpack.c.l.b16 %v1482
          %v1618 = vunpack.c.l.b16 %v1483
          %v1619 = vunpack.c.l.b16 %v1484
          %v1620 = vunpack.c.l.b16 %v1485
          %v1621 = vunpack.c.l.b16 %v1486
          %v1622 = vunpack.c.l.b16 %v1487
          %v1623 = vunpack.c.l.b16 %v1488
          %v1624 = vunpack.c.l.b16 %v1489
          %v1625 = vunpack.c.l.b16 %v1490
          %v1626 = vunpack.c.l.b16 %v1491
          %v1627 = vunpack.c.l.b16 %v1492
          %v1628 = vunpack.c.l.b16 %v1493
          %v1629 = vunpack.c.l.b16 %v1494
          %v1630 = vunpack.c.l.b16 %v1495
          %v1631 = vunpack.c.l.b16 %v1496
          %v1632 = vunpack.c.l.b16 %v1497
          %v1633 = vunpack.c.l.b16 %v1498
          %v1634 = vunpack.c.l.b16 %v1499
          %v1635 = vunpack.c.l.b16 %v1500
          %v1636 = vunpack.c.l.b16 %v1501
          %v1637 = vunpack.c.l.b16 %v1502
          %v1638 = vunpack.c.l.b16 %v1503
          %v1639 = vunpack.c.l.b16 %v1504
          %v1640 = vunpack.c.l.b16 %v1505
          %v1641 = vunpack.c.l.b16 %v1506
          %v1642 = vunpack.c.l.b16 %v1507
          %v1643 = vunpack.c.l.b16 %v1508
          %v1644 = vunpack.c.l.b16 %v1509
          %v1645 = vunpack.c.l.b16 %v1510
          %v1646 = vunpack.c.l.b16 %v1511
          %v1647 = vunpack.c.l.b16 %v1512
          %v1648 = vunpack.c.l.b16 %v1513
          %v1649 = vunpack.c.l.b16 %v1514
          %v1650 = vunpack.c.l.b16 %v1515
          %v1651 = vunpack.c.l.b16 %v1516
          %v1652 = vunpack.c.l.b16 %v1517
          %v1653 = vpack.c.b16 %v1590, %v1589
          %v1654 = vpack.c.b16 %v1592, %v1591
          %v1655 = vpack.c.b16 %v1594, %v1593
          %v1656 = vpack.c.b16 %v1596, %v1595
          %v1657 = vpack.c.b16 %v1598, %v1597
          %v1658 = vpack.c.b16 %v1600, %v1599
          %v1659 = vpack.c.b16 %v1602, %v1601
          %v1660 = vpack.c.b16 %v1604, %v1603
          %v1661 = vpack.c.b16 %v1606, %v1605
          %v1662 = vpack.c.b16 %v1608, %v1607
          %v1663 = vpack.c.b16 %v1610, %v1609
          %v1664 = vpack.c.b16 %v1612, %v1611
          %v1665 = vpack.c.b16 %v1614, %v1613
          %v1666 = vpack.c.b16 %v1616, %v1615
          %v1667 = vpack.c.b16 %v1618, %v1617
          %v1668 = vpack.c.b16 %v1620, %v1619
          %v1669 = vpack.c.b16 %v1622, %v1621
          %v1670 = vpack.c.b16 %v1624, %v1623
          %v1671 = vpack.c.b16 %v1626, %v1625
          %v1672 = vpack.c.b16 %v1628, %v1627
          %v1673 = vpack.c.b16 %v1630, %v1629
          %v1674 = vpack.c.b16 %v1632, %v1631
          %v1675 = vpack.c.b16 %v1634, %v1633
          %v1676 = vpack.c.b16 %v1636, %v1635
          %v1677 = vpack.c.b16 %v1638, %v1637
          %v1678 = vpack.c.b16 %v1640, %v1639
          %v1679 = vpack.c.b16 %v1642, %v1641
          %v1680 = vpack.c.b16 %v1644, %v1643
          %v1681 = vpack.c.b16 %v1646, %v1645
          %v1682 = vpack.c.b16 %v1648, %v1647
          %v1683 = vpack.c.b16 %v1650, %v1649
          %v1684 = vpack.c.b16 %v1652, %v1651
          %1717 = vmatprep.subr.bf16.mxu0 0
          %1718 = vmatpush1.bf16.msra.mxu0 %v1660
          %1719 = vmatprep.subr.bf16.mxu0 0
          %1720 = vmatpush1.bf16.msra.mxu0 %v1659
          %1721 = vmatprep.subr.bf16.mxu0 0
          %1722 = vmatpush1.bf16.msra.mxu0 %v1658
          %1723 = vmatprep.subr.bf16.mxu0 0
          %1724 = vmatpush1.bf16.msra.mxu0 %v1657
          %1725 = vmatprep.subr.bf16.mxu0 0
          %1726 = vmatpush1.bf16.msra.mxu0 %v1656
          %1727 = vmatprep.subr.bf16.mxu0 0
          %1728 = vmatpush1.bf16.msra.mxu0 %v1655
          %1729 = vmatprep.subr.bf16.mxu0 0
          %1730 = vmatpush1.bf16.msra.mxu0 %v1654
          %1731 = vmatprep.subr.bf16.mxu0 0
          %1732 = vmatpush1.bf16.msra.mxu0 %v1653
          %1733 = vmatprep.subr.bf16.mxu0 0
          %1734 = vmatpush2.bf16.msra.mxu0 %v1668
          %1735 = vmatprep.subr.bf16.mxu0 0
          %1736 = vmatpush2.bf16.msra.mxu0 %v1667
          %1737 = vmatprep.subr.bf16.mxu0 0
          %1738 = vmatpush2.bf16.msra.mxu0 %v1666
          %1739 = vmatprep.subr.bf16.mxu0 0
          %1740 = vmatpush2.bf16.msra.mxu0 %v1665
          %1741 = vmatprep.subr.bf16.mxu0 0
          %1742 = vmatpush2.bf16.msra.mxu0 %v1664
          %1743 = vmatprep.subr.bf16.mxu0 0
          %1744 = vmatpush2.bf16.msra.mxu0 %v1663
          %1745 = vmatprep.subr.bf16.mxu0 0
          %1746 = vmatpush2.bf16.msra.mxu0 %v1662
          %1747 = vmatprep.subr.bf16.mxu0 0
          %1748 = vmatpush2.bf16.msra.mxu0 %v1661
          %1749 = vmatprep.mubr.bf16.mxu0 %v1451
          %1750 = vmatmul.mubr.bf16.gmra.mxu0 %v1450
          %v1751 = vpop.f32.mrf.mxu0
          %v1752 = vadd.f32 %v1523, %v1751
          %v1753 = vpop.f32.mrf.mxu0
          %v1754 = vpop.f32.mrf.mxu0
          %v1755 = vpop.f32.mrf.mxu0
          %1756 = vdwg.mxu0
          %1757 = vmatprep.subr.bf16.mxu0 0
          %1758 = vmatpush1.bf16.msra.mxu0 %v1676
          %1759 = vmatprep.subr.bf16.mxu0 0
          %1760 = vmatpush1.bf16.msra.mxu0 %v1675
          %1761 = vmatprep.subr.bf16.mxu0 0
          %1762 = vmatpush1.bf16.msra.mxu0 %v1674
          %1763 = vmatprep.subr.bf16.mxu0 0
          %1764 = vmatpush1.bf16.msra.mxu0 %v1673
          %1765 = vmatprep.subr.bf16.mxu0 0
          %1766 = vmatpush1.bf16.msra.mxu0 %v1672
          %1767 = vmatprep.subr.bf16.mxu0 0
          %1768 = vmatpush1.bf16.msra.mxu0 %v1671
          %1769 = vmatprep.subr.bf16.mxu0 0
          %1770 = vmatpush1.bf16.msra.mxu0 %v1670
          %1771 = vmatprep.subr.bf16.mxu0 0
          %1772 = vmatpush1.bf16.msra.mxu0 %v1669
          %1773 = vmatprep.subr.bf16.mxu0 0
          %1774 = vmatpush2.bf16.msra.mxu0 %v1684
          %1775 = vmatprep.subr.bf16.mxu0 0
          %1776 = vmatpush2.bf16.msra.mxu0 %v1683
          %1777 = vmatprep.subr.bf16.mxu0 0
          %1778 = vmatpush2.bf16.msra.mxu0 %v1682
          %1779 = vmatprep.subr.bf16.mxu0 0
          %1780 = vmatpush2.bf16.msra.mxu0 %v1681
          %1781 = vmatprep.subr.bf16.mxu0 0
          %1782 = vmatpush2.bf16.msra.mxu0 %v1680
          %1783 = vmatprep.subr.bf16.mxu0 0
          %1784 = vmatpush2.bf16.msra.mxu0 %v1679
          %1785 = vmatprep.subr.bf16.mxu0 0
          %1786 = vmatpush2.bf16.msra.mxu0 %v1678
          %1787 = vmatprep.subr.bf16.mxu0 0
          %1788 = vmatpush2.bf16.msra.mxu0 %v1677
          %1789 = vmatprep.mubr.bf16.mxu0 %v1453
          %1790 = vmatmul.mubr.bf16.gmra.mxu0 %v1452
          %v1791 = vpop.f32.mrf.mxu0
          %v1792 = vadd.f32 %v1752, %v1791
          %v1793 = vpop.f32.mrf.mxu0
          %v1794 = vpop.f32.mrf.mxu0
          %v1795 = vpop.f32.mrf.mxu0
          %1796 = vdwg.mxu0
          %1797 = vst [vmem:[#allocation12] sm:$0xff] %v1792
        $region68: #{tpu_custom_call.1} parent=39 // pred_fallthru
          _
        // Predicated region
        $region69: #{tpu_custom_call.1} parent=39 // pred_check
          %p1798 = pneg %p150
        $region70: #{tpu_custom_call.1} parent=39 // pred_check_branch
          %1800 = sbr.rel (%p1798) target = $region72
        $region71: #{tpu_custom_call.1} parent=39 // pred_region
          %s1802 = ssub.s32 128, 128
          %1803 = vsyncadd [#allocation5], %s1802
          %s1805 = sshll.u32 [#allocation12], 4
          %s1806 = int_to_ptr.vmem [resolvable:$true] %s1805
          %1808 = dma.vmem_to_hbm [thread:$0]  %s1806, 128, %s5, [#allocation5]
        $region72: #{tpu_custom_call.1} parent=39 // pred_fallthru
          _
        // Predicated region
        $region73: #{tpu_custom_call.1} parent=39 // pred_check
          %p1809 = pneg %p150
        $region74: #{tpu_custom_call.1} parent=39 // pred_check_branch
          %1811 = sbr.rel (%p1809) target = $region76
        $region75: #{tpu_custom_call.1} parent=39 // pred_region
          %1812 = dma.done [#allocation5], 128
        $region76: #{tpu_custom_call.1} parent=39 // pred_fallthru
          _
      $region40: #{tpu_custom_call.1} parent=5 // pred_fallthru
        _
      %p1813 = scmp.le.s32.totalorder 2, %s17
      // Predicated region
      $region77: #{tpu_custom_call.1} parent=5 // pred_check
        %p1814 = pneg %p1813
      $region78: #{tpu_custom_call.1} parent=5 // pred_check_branch
        %1816 = sbr.rel (%p1814) target = $region80
      $region79: #{tpu_custom_call.1} parent=5 // pred_region
        %s1817 = ssub.s32 %s17, 2
      $region80: #{tpu_custom_call.1} parent=5 // pred_fallthru
        _
    $region6: #{tpu_custom_call.1} parent=1 // loop_footer
      %s21 = sadd.s32 1, %s17
    $region7: #{tpu_custom_call.1} parent=1 // loop_footer_branch
      %16 = sbr.rel target = $region3
    $region8: #{tpu_custom_call.1} parent=1 // loop_exit
      _
    %1818 = vsyncpa [#allocation4], 1
    %s1819 = scalar_lea.sflag [#allocation4], 1
    %1820 = vsyncpa %s1819, 1
    %1821 = vsyncpa [#allocation7], 1
    %s1822 = scalar_lea.sflag [#allocation7], 1
    %1823 = vsyncpa %s1822, 1
    %1824 = vsyncpa [#allocation10], 1
    %1825 = vsyncpa [#allocation5], 1
    %s1826 = scalar_lea.sflag [#allocation5], 1
    %1827 = vsyncpa %s1826, 1

</llo_original>
